<compile_context>
chip_gen: v6e
topology: v6e:2x2x1
jax: 0.10.0
libtpu: 0.0.40
codegen_flags: <defaults>
</compile_context>

<pallas_src>
import jax
import jax.numpy as jnp
from jax.experimental import pallas as pl
from jax.experimental.pallas import tpu as pltpu

D_IN = 28 * 28      # 784 (multiple of 16 -> clean bf16 sublane layout)
HID = 512
D_OUT = 10
D_OUT_PAD = 128     # lane-dense output slab


def _round_up(x, m):
    return (x + m - 1) // m * m


def mlp_kernel(x_ref, w1_ref, b1_ref, w2_ref, b2_ref, w3_ref, b3_ref, o_ref):
    # x_ref: (bt, 784) bf16; w*: bf16; b*: f32 (1, N); o_ref: (bt, 128) f32.
    x = x_ref[...]
    # MXU matmuls in bf16 with f32 accumulation; bias-add + ReLU stay in f32 on
    # the accumulator (fast VPU path on every generation incl. v5e).
    h1 = jnp.dot(x, w1_ref[...], preferred_element_type=jnp.float32) + b1_ref[...]
    h1 = jnp.maximum(h1, 0.0).astype(jnp.bfloat16)
    h2 = jnp.dot(h1, w2_ref[...], preferred_element_type=jnp.float32) + b2_ref[...]
    h2 = jnp.maximum(h2, 0.0).astype(jnp.bfloat16)
    h3 = jnp.dot(h2, w3_ref[...], preferred_element_type=jnp.float32) + b3_ref[...]
    o_ref[...] = jnp.maximum(h3, 0.0)


def prepare_params(params):
    """ONE-TIME parameter preparation (hoisted out of the forward path):
    bf16 weights (halves weight HBM traffic, native MXU dtype), f32 biases as
    (1, N) rows, last layer lane-padded to 128 output lanes."""
    w1, b1, w2, b2, w3, b3 = params
    w1p = w1.astype(jnp.bfloat16)                                   # (784, 512)
    w2p = w2.astype(jnp.bfloat16)                                   # (512, 512)
    w3p = jnp.pad(w3.astype(jnp.bfloat16),
                  ((0, 0), (0, D_OUT_PAD - D_OUT)))                 # (512, 128)
    b1p = b1.astype(jnp.float32).reshape(1, HID)
    b2p = b2.astype(jnp.float32).reshape(1, HID)
    b3p = jnp.pad(b3.astype(jnp.float32).reshape(1, D_OUT),
                  ((0, 0), (0, D_OUT_PAD - D_OUT)))                 # (1, 128)
    return (w1p, b1p, w2p, b2p, w3p, b3p)


def mlp_forward(x_nchw, prepared_params, *, batch_tile=512):
    """x_nchw: (B, 1, 28, 28) float32 -> logits (B, 10) float32.
    `prepared_params` must come from prepare_params() (done once, not per call)."""
    w1p, b1p, w2p, b2p, w3p, b3p = prepared_params
    B = x_nchw.shape[0]

    # Tile heuristic (per review): a single grid step for small batches; only
    # split the batch across grid steps (and thus across v7x TensorCores via
    # dimension_semantics=("parallel",)) once per-step work is large enough to
    # amortize duplicating the ~1.5 MiB stationary weight set per core.
    if B <= batch_tile:
        bt = _round_up(B, 16)          # multiple of 16 -> unmasked bf16 sublanes
    else:
        bt = batch_tile                # 512: >= 256 rows of M per TC when split
    Bp = _round_up(B, bt)

    # Flatten NCHW -> (B, 784) (free reshape of contiguous data), cast to bf16,
    # and pad only the batch rows (zero rows are inert and sliced off below).
    # No feature-dim padding: K=784 is the full array dim, Mosaic lane-pads free.
    x = x_nchw.reshape(B, D_IN).astype(jnp.bfloat16)
    if Bp != B:
        x = jnp.pad(x, ((0, Bp - B), (0, 0)))

    # Weights/biases are grid-invariant (constant index_map): single-buffer them.
    stationary = dict(pipeline_mode=pl.Buffered(1))

    grid = (Bp // bt,)
    out = pl.pallas_call(
        mlp_kernel,
        out_shape=jax.ShapeDtypeStruct((Bp, D_OUT_PAD), jnp.float32),
        grid_spec=pltpu.PrefetchScalarGridSpec(
            num_scalar_prefetch=0,
            grid=grid,
            in_specs=[
                pl.BlockSpec((bt, D_IN), lambda i: (i, 0)),                      # x tile
                pl.BlockSpec((D_IN, HID), lambda i: (0, 0), **stationary),       # w1
                pl.BlockSpec((1, HID), lambda i: (0, 0), **stationary),          # b1
                pl.BlockSpec((HID, HID), lambda i: (0, 0), **stationary),        # w2
                pl.BlockSpec((1, HID), lambda i: (0, 0), **stationary),          # b2
                pl.BlockSpec((HID, D_OUT_PAD), lambda i: (0, 0), **stationary),  # w3 (padded)
                pl.BlockSpec((1, D_OUT_PAD), lambda i: (0, 0), **stationary),    # b3 (padded)
            ],
            out_specs=pl.BlockSpec((bt, D_OUT_PAD), lambda i: (i, 0)),
        ),
        compiler_params=pltpu.CompilerParams(
            dimension_semantics=("parallel",),
            # Working set at bt=512 is ~5-6 MiB (x/out double-buffered tiles +
            # 1.5 MiB bf16 weights + f32 intermediates) -- far under 32 MiB,
            # which is the scoped default on every generation incl. v7x.
            vmem_limit_bytes=32 * 1024 * 1024,
        ),
    )(x, w1p, b1p, w2p, b2p, w3p, b3p)

    # Strip batch padding and the lane padding of the last layer.
    return out[:B, :D_OUT]


def init_params(key):
    """Deterministic init mimicking nn.Linear's U(-1/sqrt(fan_in), 1/sqrt(fan_in)).
    Weights stored as (in_features, out_features) so the kernel computes x @ W + b."""
    def linear(k, fan_in, fan_out):
        kw, kb = jax.random.split(k)
        bound = 1.0 / (fan_in ** 0.5)
        w = jax.random.uniform(kw, (fan_in, fan_out), jnp.float32, -bound, bound)
        b = jax.random.uniform(kb, (1, fan_out), jnp.float32, -bound, bound)
        return w, b

    k1, k2, k3 = jax.random.split(key, 3)
    w1, b1 = linear(k1, D_IN, HID)
    w2, b2 = linear(k2, HID, HID)
    w3, b3 = linear(k3, HID, D_OUT)
    return (w1, b1, w2, b2, w3, b3)


def reference_forward(x_nchw, params):
    """Pure-JAX reference using the same bf16-weight / f32-accumulate recipe."""
    w1, b1, w2, b2, w3, b3 = params
    x = x_nchw.reshape(x_nchw.shape[0], -1).astype(jnp.bfloat16)
    h = jnp.dot(x, w1.astype(jnp.bfloat16), preferred_element_type=jnp.float32) + b1
    h = jnp.maximum(h, 0.0).astype(jnp.bfloat16)
    h = jnp.dot(h, w2.astype(jnp.bfloat16), preferred_element_type=jnp.float32) + b2
    h = jnp.maximum(h, 0.0).astype(jnp.bfloat16)
    h = jnp.dot(h, w3.astype(jnp.bfloat16), preferred_element_type=jnp.float32) + b3
    return jnp.maximum(h, 0.0)


if __name__ == "__main__":
    key = jax.random.PRNGKey(0)
    k_params, k_x = jax.random.split(key)
    params = init_params(k_params)

    # One-time parameter preparation (hoisted out of the forward path).
    prepared = prepare_params(params)
    prepared = jax.block_until_ready(prepared)

    # Small MNIST-like batch: (B=16, C=1, H=28, W=28), NCHW as in PyTorch.
    x = jax.random.normal(k_x, (16, 1, 28, 28), jnp.float32)

    fwd = jax.jit(lambda xs: mlp_forward(xs, prepared))
    out = jax.block_until_ready(fwd(x))

    ref = reference_forward(x, params)
    assert out.shape == (16, D_OUT) and out.dtype == jnp.float32
    assert jnp.allclose(out, ref, atol=1e-2, rtol=1e-2), "mismatch vs reference"

    print("KERNEL_OK")
</pallas_src>

<mosaic_0001>
module attributes {stable_mosaic.version = 11 : i64} {
  func.func @mlp_kernel(%arg0: i32, %arg1: memref<16x784xbf16, #tpu.memory_space<vmem>>, %arg2: memref<784x512xbf16, #tpu.memory_space<vmem>>, %arg3: memref<1x512xf32, #tpu.memory_space<vmem>>, %arg4: memref<512x512xbf16, #tpu.memory_space<vmem>>, %arg5: memref<1x512xf32, #tpu.memory_space<vmem>>, %arg6: memref<512x128xbf16, #tpu.memory_space<vmem>>, %arg7: memref<1x128xf32, #tpu.memory_space<vmem>>, %arg8: memref<16x128xf32, #tpu.memory_space<vmem>>) attributes {dimension_semantics = [#tpu.dimension_semantics<parallel>], iteration_bounds = array<i64: 1>, scalar_prefetch = 0 : i64, scratch_operands = 0 : i64, tpu.core_type = #tpu.core_type<tc>, window_params = [{transform_indices = @transform_0, window_bounds = array<i64: 16, 784>}, {pipeline_mode = #tpu.pipeline_mode<synchronous>, transform_indices = @transform_1, window_bounds = array<i64: 784, 512>}, {pipeline_mode = #tpu.pipeline_mode<synchronous>, transform_indices = @transform_2, window_bounds = array<i64: 1, 512>}, {pipeline_mode = #tpu.pipeline_mode<synchronous>, transform_indices = @transform_3, window_bounds = array<i64: 512, 512>}, {pipeline_mode = #tpu.pipeline_mode<synchronous>, transform_indices = @transform_4, window_bounds = array<i64: 1, 512>}, {pipeline_mode = #tpu.pipeline_mode<synchronous>, transform_indices = @transform_5, window_bounds = array<i64: 512, 128>}, {pipeline_mode = #tpu.pipeline_mode<synchronous>, transform_indices = @transform_6, window_bounds = array<i64: 1, 128>}, {transform_indices = @transform_7, window_bounds = array<i64: 16, 128>}]} {
    %c0 = arith.constant 0 : index
    %c0_0 = arith.constant 0 : index
    %0 = vector.load %arg1[%c0, %c0_0] : memref<16x784xbf16, #tpu.memory_space<vmem>>, vector<16x784xbf16>
    %c0_1 = arith.constant 0 : index
    %c0_2 = arith.constant 0 : index
    %1 = vector.load %arg2[%c0_1, %c0_2] : memref<784x512xbf16, #tpu.memory_space<vmem>>, vector<784x512xbf16>
    %cst = arith.constant dense<0.000000e+00> : vector<16x512xf32>
    %2 = tpu.matmul %0, %1, %cst {dimension_numbers = #tpu.dot_dimension_numbers<[1], [0], [0], [1], [0, 0, 1, 1], [], []>} : vector<16x784xbf16>, vector<784x512xbf16>, vector<16x512xf32> -> vector<16x512xf32>
    %c0_3 = arith.constant 0 : index
    %c0_4 = arith.constant 0 : index
    %3 = vector.load %arg3[%c0_3, %c0_4] : memref<1x512xf32, #tpu.memory_space<vmem>>, vector<1x512xf32>
    %4 = vector.broadcast %3 : vector<1x512xf32> to vector<16x512xf32>
    %5 = arith.addf %2, %4 : vector<16x512xf32>
    %cst_5 = arith.constant 0.000000e+00 : f32
    %6 = vector.broadcast %cst_5 : f32 to vector<16x512xf32>
    %7 = arith.maximumf %5, %6 : vector<16x512xf32>
    %8 = arith.truncf %7 : vector<16x512xf32> to vector<16x512xbf16>
    %c0_6 = arith.constant 0 : index
    %c0_7 = arith.constant 0 : index
    %9 = vector.load %arg4[%c0_6, %c0_7] : memref<512x512xbf16, #tpu.memory_space<vmem>>, vector<512x512xbf16>
    %cst_8 = arith.constant dense<0.000000e+00> : vector<16x512xf32>
    %10 = tpu.matmul %8, %9, %cst_8 {dimension_numbers = #tpu.dot_dimension_numbers<[1], [0], [0], [1], [0, 0, 1, 1], [], []>} : vector<16x512xbf16>, vector<512x512xbf16>, vector<16x512xf32> -> vector<16x512xf32>
    %c0_9 = arith.constant 0 : index
    %c0_10 = arith.constant 0 : index
    %11 = vector.load %arg5[%c0_9, %c0_10] : memref<1x512xf32, #tpu.memory_space<vmem>>, vector<1x512xf32>
    %12 = vector.broadcast %11 : vector<1x512xf32> to vector<16x512xf32>
    %13 = arith.addf %10, %12 : vector<16x512xf32>
    %cst_11 = arith.constant 0.000000e+00 : f32
    %14 = vector.broadcast %cst_11 : f32 to vector<16x512xf32>
    %15 = arith.maximumf %13, %14 : vector<16x512xf32>
    %16 = arith.truncf %15 : vector<16x512xf32> to vector<16x512xbf16>
    %c0_12 = arith.constant 0 : index
    %c0_13 = arith.constant 0 : index
    %17 = vector.load %arg6[%c0_12, %c0_13] : memref<512x128xbf16, #tpu.memory_space<vmem>>, vector<512x128xbf16>
    %cst_14 = arith.constant dense<0.000000e+00> : vector<16x128xf32>
    %18 = tpu.matmul %16, %17, %cst_14 {dimension_numbers = #tpu.dot_dimension_numbers<[1], [0], [0], [1], [0, 0, 1, 1], [], []>} : vector<16x512xbf16>, vector<512x128xbf16>, vector<16x128xf32> -> vector<16x128xf32>
    %c0_15 = arith.constant 0 : index
    %c0_16 = arith.constant 0 : index
    %19 = vector.load %arg7[%c0_15, %c0_16] : memref<1x128xf32, #tpu.memory_space<vmem>>, vector<1x128xf32>
    %20 = vector.broadcast %19 : vector<1x128xf32> to vector<16x128xf32>
    %21 = arith.addf %18, %20 : vector<16x128xf32>
    %cst_17 = arith.constant 0.000000e+00 : f32
    %22 = vector.broadcast %cst_17 : f32 to vector<16x128xf32>
    %23 = arith.maximumf %21, %22 : vector<16x128xf32>
    %c0_18 = arith.constant 0 : index
    %c0_19 = arith.constant 0 : index
    %24 = vector.load %arg8[%c0_18, %c0_19] : memref<16x128xf32, #tpu.memory_space<vmem>>, vector<16x128xf32>
    tpu.vector_store %arg8[%c0_18, %c0_19], %23 {strides = array<i32>} : memref<16x128xf32, #tpu.memory_space<vmem>>, vector<16x128xf32>,
    return
  }
  func.func @transform_0(%arg0: i32) -> (i32, i32) {
    %c0_i32 = arith.constant 0 : i32
    %c0_i32_0 = arith.constant 0 : i32
    return %arg0, %c0_i32 : i32, i32
  }
  func.func @transform_1(%arg0: i32) -> (i32, i32) {
    %c0_i32 = arith.constant 0 : i32
    %c0_i32_0 = arith.constant 0 : i32
    %c0_i32_1 = arith.constant 0 : i32
    return %c0_i32, %c0_i32_0 : i32, i32
  }
  func.func @transform_2(%arg0: i32) -> (i32, i32) {
    %c0_i32 = arith.constant 0 : i32
    %c0_i32_0 = arith.constant 0 : i32
    %c0_i32_1 = arith.constant 0 : i32
    return %c0_i32, %c0_i32_0 : i32, i32
  }
  func.func @transform_3(%arg0: i32) -> (i32, i32) {
    %c0_i32 = arith.constant 0 : i32
    %c0_i32_0 = arith.constant 0 : i32
    %c0_i32_1 = arith.constant 0 : i32
    return %c0_i32, %c0_i32_0 : i32, i32
  }
  func.func @transform_4(%arg0: i32) -> (i32, i32) {
    %c0_i32 = arith.constant 0 : i32
    %c0_i32_0 = arith.constant 0 : i32
    %c0_i32_1 = arith.constant 0 : i32
    return %c0_i32, %c0_i32_0 : i32, i32
  }
  func.func @transform_5(%arg0: i32) -> (i32, i32) {
    %c0_i32 = arith.constant 0 : i32
    %c0_i32_0 = arith.constant 0 : i32
    %c0_i32_1 = arith.constant 0 : i32
    return %c0_i32, %c0_i32_0 : i32, i32
  }
  func.func @transform_6(%arg0: i32) -> (i32, i32) {
    %c0_i32 = arith.constant 0 : i32
    %c0_i32_0 = arith.constant 0 : i32
    %c0_i32_1 = arith.constant 0 : i32
    return %c0_i32, %c0_i32_0 : i32, i32
  }
  func.func @transform_7(%arg0: i32) -> (i32, i32) {
    %c0_i32 = arith.constant 0 : i32
    %c0_i32_0 = arith.constant 0 : i32
    return %arg0, %c0_i32 : i32, i32
  }
}

</mosaic_0001>

<llo_original>
// kernel: _lambda_.1
$region0: #{_lambda_.1}
  #allocation0 [shape = 'u32[]', space=smem, size = 0x4, offset = 0x4, fixed_abs, tag = 'smem constant byte address 0x4 - core index']
  #allocation1 [shape = 'u32[144,128]{1,0:T(1,128)}', space=vmem, size = 0x12000, scoped, tag = 'internal scratch']
  %s0 = inlined_call_operand.vmem [shape: bf16[16,784], index: 0, kind: input, shape index: {}]
  %s1 = inlined_call_operand.hbm [shape: bf16[784,512], index: 1, kind: input, shape index: {}]
  %s2 = inlined_call_operand.vmem [shape: f32[1,512], index: 2, kind: input, shape index: {}]
  %s3 = inlined_call_operand.hbm [shape: bf16[512,512], index: 3, kind: input, shape index: {}]
  %s4 = inlined_call_operand.vmem [shape: f32[1,512], index: 4, kind: input, shape index: {}]
  %s5 = inlined_call_operand.vmem [shape: bf16[512,128], index: 5, kind: input, shape index: {}]
  %s6 = inlined_call_operand.vmem [shape: f32[1,128], index: 6, kind: input, shape index: {}]
  %s7 = inlined_call_operand.hbm [shape: f32[16,128], index: 7, kind: output, shape index: {}]
  %s8 = sld [smem:[#allocation0]]
  $region46: #{_lambda_.1} parent=0
    _
  %s10 = ssub.s32 1, %s8
  %s11 = scalar_select 0, %s10, %s8
  $region1: #{_lambda_.1} parent=0
    #allocation2 [shape = 'u8[802816]{0}', space=vmem, size = 0xc4000, scoped, tag = 'input window, operand 1, single buffered']
    #allocation3 [shape = 's32[1]{0}', space=sflag, size = 0x4, scoped, tag = 'scoped memory for _lambda_.1']
    #allocation4 [shape = 's32[1]{0}', space=sflag, size = 0x4, scoped, tag = 'scoped memory for _lambda_.1']
    #allocation5 [shape = 'u8[524288]{0}', space=vmem, size = 0x80000, scoped, tag = 'input window, operand 3, single buffered']
    #allocation6 [shape = 's32[1]{0}', space=sflag, size = 0x4, scoped, tag = 'scoped memory for _lambda_.1']
    #allocation7 [shape = 'u8[8192]{0}', space=vmem, size = 0x2000, scoped, tag = 'output window, operand 0, single buffered']
    %12 = vsyncpa [#allocation3], 0
    %13 = vsyncpa [#allocation6], 0
    %14 = vsyncpa [#allocation4], 0
    // Predicated region
    $region2: #{_lambda_.1} parent=1 // pred_check
      _
    $region3: #{_lambda_.1} parent=1 // pred_check_branch
      %16 = sbr.rel (0) target = $region5
    $region4: #{_lambda_.1} parent=1 // pred_region
      _
    $region5: #{_lambda_.1} parent=1 // pred_fallthru
      _
    // Predicated region
    $region6: #{_lambda_.1} parent=1 // pred_check
      _
    $region7: #{_lambda_.1} parent=1 // pred_check_branch
      %18 = sbr.rel (0) target = $region9
    $region8: #{_lambda_.1} parent=1 // pred_region
      %s20 = ssub.s32 25088, 25088
      %21 = vsyncadd [#allocation3], %s20
      %s22 = sshll.u32 [#allocation2], 4
      %s23 = int_to_ptr.vmem [resolvable:$true] %s22
      %28 = dma.hbm_to_vmem [thread:$0]  %s1, 25088, %s23, [#allocation3], 256, 256, 16
    $region9: #{_lambda_.1} parent=1 // pred_fallthru
      _
    // Predicated region
    $region10: #{_lambda_.1} parent=1 // pred_check
      _
    $region11: #{_lambda_.1} parent=1 // pred_check_branch
      %30 = sbr.rel (0) target = $region13
    $region12: #{_lambda_.1} parent=1 // pred_region
      _
    $region13: #{_lambda_.1} parent=1 // pred_fallthru
      _
    // Predicated region
    $region14: #{_lambda_.1} parent=1 // pred_check
      _
    $region15: #{_lambda_.1} parent=1 // pred_check_branch
      %32 = sbr.rel (0) target = $region17
    $region16: #{_lambda_.1} parent=1 // pred_region
      %s34 = ssub.s32 16384, 16384
      %35 = vsyncadd [#allocation6], %s34
      %s36 = sshll.u32 [#allocation5], 4
      %s37 = int_to_ptr.vmem [resolvable:$true] %s36
      %42 = dma.hbm_to_vmem [thread:$0]  %s3, 16384, %s37, [#allocation6], 256, 256, 16
    $region17: #{_lambda_.1} parent=1 // pred_fallthru
      _
    // Predicated region
    $region18: #{_lambda_.1} parent=1 // pred_check
      _
    $region19: #{_lambda_.1} parent=1 // pred_check_branch
      %44 = sbr.rel (0) target = $region21
    $region20: #{_lambda_.1} parent=1 // pred_region
      _
    $region21: #{_lambda_.1} parent=1 // pred_fallthru
      _
    // Predicated region
    $region22: #{_lambda_.1} parent=1 // pred_check
      _
    $region23: #{_lambda_.1} parent=1 // pred_check_branch
      %46 = sbr.rel (0) target = $region25
    $region24: #{_lambda_.1} parent=1 // pred_region
      _
    $region25: #{_lambda_.1} parent=1 // pred_fallthru
      _
    // Predicated region
    $region26: #{_lambda_.1} parent=1 // pred_check
      _
    $region27: #{_lambda_.1} parent=1 // pred_check_branch
      %48 = sbr.rel (0) target = $region29
    $region28: #{_lambda_.1} parent=1 // pred_region
      _
    $region29: #{_lambda_.1} parent=1 // pred_fallthru
      _
    // Predicated region
    $region30: #{_lambda_.1} parent=1 // pred_check
      _
    $region31: #{_lambda_.1} parent=1 // pred_check_branch
      %50 = sbr.rel (0) target = $region33
    $region32: #{_lambda_.1} parent=1 // pred_region
      %51 = dma.done [#allocation3], 25088
    $region33: #{_lambda_.1} parent=1 // pred_fallthru
      _
    // Predicated region
    $region34: #{_lambda_.1} parent=1 // pred_check
      _
    $region35: #{_lambda_.1} parent=1 // pred_check_branch
      %53 = sbr.rel (0) target = $region37
    $region36: #{_lambda_.1} parent=1 // pred_region
      %54 = dma.done [#allocation6], 16384
    $region37: #{_lambda_.1} parent=1 // pred_fallthru
      _
    %v56 = vld [vmem:[%s0] sm:$0xff]
    %v57 = vld [vmem:[%s0 + $0x8] sm:$0xff]
    %v58 = vld [vmem:[%s0 + $0x10] sm:$0xff]
    %v59 = vld [vmem:[%s0 + $0x18] sm:$0xf]
    %v60 = vld [vmem:[%s0 + $0x1c] sm:$0xff]
    %v61 = vld [vmem:[%s0 + $0x24] sm:$0xff]
    %v62 = vld [vmem:[%s0 + $0x2c] sm:$0xff]
    %v63 = vld [vmem:[%s0 + $0x34] sm:$0xf]
    %v64 = vld [vmem:[#allocation2] sm:$0xff]
    %v65 = vld [vmem:[#allocation2 + $0x8] sm:$0xff]
    %v66 = vld [vmem:[#allocation2 + $0x10] sm:$0xff]
    %v67 = vld [vmem:[#allocation2 + $0x18] sm:$0xff]
    %v68 = vld [vmem:[#allocation2 + $0x20] sm:$0xff]
    %v69 = vld [vmem:[#allocation2 + $0x28] sm:$0xff]
    %v70 = vld [vmem:[#allocation2 + $0x30] sm:$0xff]
    %v71 = vld [vmem:[#allocation2 + $0x38] sm:$0xff]
    %v72 = vld [vmem:[#allocation2 + $0x40] sm:$0xff]
    %v73 = vld [vmem:[#allocation2 + $0x48] sm:$0xff]
    %v74 = vld [vmem:[#allocation2 + $0x50] sm:$0xff]
    %v75 = vld [vmem:[#allocation2 + $0x58] sm:$0xff]
    %v76 = vld [vmem:[#allocation2 + $0x60] sm:$0xff]
    %v77 = vld [vmem:[#allocation2 + $0x68] sm:$0xff]
    %v78 = vld [vmem:[#allocation2 + $0x70] sm:$0xff]
    %v79 = vld [vmem:[#allocation2 + $0x78] sm:$0xff]
    %v80 = vld [vmem:[#allocation2 + $0x80] sm:$0xff]
    %v81 = vld [vmem:[#allocation2 + $0x88] sm:$0xff]
    %v82 = vld [vmem:[#allocation2 + $0x90] sm:$0xff]
    %v83 = vld [vmem:[#allocation2 + $0x98] sm:$0xff]
    %v84 = vld [vmem:[#allocation2 + $0xa0] sm:$0xff]
    %v85 = vld [vmem:[#allocation2 + $0xa8] sm:$0xff]
    %v86 = vld [vmem:[#allocation2 + $0xb0] sm:$0xff]
    %v87 = vld [vmem:[#allocation2 + $0xb8] sm:$0xff]
    %v88 = vld [vmem:[#allocation2 + $0xc0] sm:$0xff]
    %v89 = vld [vmem:[#allocation2 + $0xc8] sm:$0xff]
    %v90 = vld [vmem:[#allocation2 + $0xd0] sm:$0xff]
    %v91 = vld [vmem:[#allocation2 + $0xd8] sm:$0xff]
    %v92 = vld [vmem:[#allocation2 + $0xe0] sm:$0xff]
    %v93 = vld [vmem:[#allocation2 + $0xe8] sm:$0xff]
    %v94 = vld [vmem:[#allocation2 + $0xf0] sm:$0xff]
    %v95 = vld [vmem:[#allocation2 + $0xf8] sm:$0xff]
    %v96 = vld [vmem:[#allocation2 + $0x100] sm:$0xff]
    %v97 = vld [vmem:[#allocation2 + $0x108] sm:$0xff]
    %v98 = vld [vmem:[#allocation2 + $0x110] sm:$0xff]
    %v99 = vld [vmem:[#allocation2 + $0x118] sm:$0xff]
    %v100 = vld [vmem:[#allocation2 + $0x120] sm:$0xff]
    %v101 = vld [vmem:[#allocation2 + $0x128] sm:$0xff]
    %v102 = vld [vmem:[#allocation2 + $0x130] sm:$0xff]
    %v103 = vld [vmem:[#allocation2 + $0x138] sm:$0xff]
    %v104 = vld [vmem:[#allocation2 + $0x140] sm:$0xff]
    %v105 = vld [vmem:[#allocation2 + $0x148] sm:$0xff]
    %v106 = vld [vmem:[#allocation2 + $0x150] sm:$0xff]
    %v107 = vld [vmem:[#allocation2 + $0x158] sm:$0xff]
    %v108 = vld [vmem:[#allocation2 + $0x160] sm:$0xff]
    %v109 = vld [vmem:[#allocation2 + $0x168] sm:$0xff]
    %v110 = vld [vmem:[#allocation2 + $0x170] sm:$0xff]
    %v111 = vld [vmem:[#allocation2 + $0x178] sm:$0xff]
    %v112 = vld [vmem:[#allocation2 + $0x180] sm:$0xff]
    %v113 = vld [vmem:[#allocation2 + $0x188] sm:$0xff]
    %v114 = vld [vmem:[#allocation2 + $0x190] sm:$0xff]
    %v115 = vld [vmem:[#allocation2 + $0x198] sm:$0xff]
    %v116 = vld [vmem:[#allocation2 + $0x1a0] sm:$0xff]
    %v117 = vld [vmem:[#allocation2 + $0x1a8] sm:$0xff]
    %v118 = vld [vmem:[#allocation2 + $0x1b0] sm:$0xff]
    %v119 = vld [vmem:[#allocation2 + $0x1b8] sm:$0xff]
    %v120 = vld [vmem:[#allocation2 + $0x1c0] sm:$0xff]
    %v121 = vld [vmem:[#allocation2 + $0x1c8] sm:$0xff]
    %v122 = vld [vmem:[#allocation2 + $0x1d0] sm:$0xff]
    %v123 = vld [vmem:[#allocation2 + $0x1d8] sm:$0xff]
    %v124 = vld [vmem:[#allocation2 + $0x1e0] sm:$0xff]
    %v125 = vld [vmem:[#allocation2 + $0x1e8] sm:$0xff]
    %v126 = vld [vmem:[#allocation2 + $0x1f0] sm:$0xff]
    %v127 = vld [vmem:[#allocation2 + $0x1f8] sm:$0xff]
    %v128 = vld [vmem:[#allocation2 + $0x200] sm:$0xff]
    %v129 = vld [vmem:[#allocation2 + $0x208] sm:$0xff]
    %v130 = vld [vmem:[#allocation2 + $0x210] sm:$0xff]
    %v131 = vld [vmem:[#allocation2 + $0x218] sm:$0xff]
    %v132 = vld [vmem:[#allocation2 + $0x220] sm:$0xff]
    %v133 = vld [vmem:[#allocation2 + $0x228] sm:$0xff]
    %v134 = vld [vmem:[#allocation2 + $0x230] sm:$0xff]
    %v135 = vld [vmem:[#allocation2 + $0x238] sm:$0xff]
    %v136 = vld [vmem:[#allocation2 + $0x240] sm:$0xff]
    %v137 = vld [vmem:[#allocation2 + $0x248] sm:$0xff]
    %v138 = vld [vmem:[#allocation2 + $0x250] sm:$0xff]
    %v139 = vld [vmem:[#allocation2 + $0x258] sm:$0xff]
    %v140 = vld [vmem:[#allocation2 + $0x260] sm:$0xff]
    %v141 = vld [vmem:[#allocation2 + $0x268] sm:$0xff]
    %v142 = vld [vmem:[#allocation2 + $0x270] sm:$0xff]
    %v143 = vld [vmem:[#allocation2 + $0x278] sm:$0xff]
    %v144 = vld [vmem:[#allocation2 + $0x280] sm:$0xff]
    %v145 = vld [vmem:[#allocation2 + $0x288] sm:$0xff]
    %v146 = vld [vmem:[#allocation2 + $0x290] sm:$0xff]
    %v147 = vld [vmem:[#allocation2 + $0x298] sm:$0xff]
    %v148 = vld [vmem:[#allocation2 + $0x2a0] sm:$0xff]
    %v149 = vld [vmem:[#allocation2 + $0x2a8] sm:$0xff]
    %v150 = vld [vmem:[#allocation2 + $0x2b0] sm:$0xff]
    %v151 = vld [vmem:[#allocation2 + $0x2b8] sm:$0xff]
    %v152 = vld [vmem:[#allocation2 + $0x2c0] sm:$0xff]
    %v153 = vld [vmem:[#allocation2 + $0x2c8] sm:$0xff]
    %v154 = vld [vmem:[#allocation2 + $0x2d0] sm:$0xff]
    %v155 = vld [vmem:[#allocation2 + $0x2d8] sm:$0xff]
    %v156 = vld [vmem:[#allocation2 + $0x2e0] sm:$0xff]
    %v157 = vld [vmem:[#allocation2 + $0x2e8] sm:$0xff]
    %v158 = vld [vmem:[#allocation2 + $0x2f0] sm:$0xff]
    %v159 = vld [vmem:[#allocation2 + $0x2f8] sm:$0xff]
    %v160 = vld [vmem:[#allocation2 + $0x300] sm:$0xff]
    %v161 = vld [vmem:[#allocation2 + $0x308] sm:$0xff]
    %v162 = vld [vmem:[#allocation2 + $0x310] sm:$0xff]
    %v163 = vld [vmem:[#allocation2 + $0x318] sm:$0xff]
    %v164 = vld [vmem:[#allocation2 + $0x320] sm:$0xff]
    %v165 = vld [vmem:[#allocation2 + $0x328] sm:$0xff]
    %v166 = vld [vmem:[#allocation2 + $0x330] sm:$0xff]
    %v167 = vld [vmem:[#allocation2 + $0x338] sm:$0xff]
    %v168 = vld [vmem:[#allocation2 + $0x340] sm:$0xff]
    %v169 = vld [vmem:[#allocation2 + $0x348] sm:$0xff]
    %v170 = vld [vmem:[#allocation2 + $0x350] sm:$0xff]
    %v171 = vld [vmem:[#allocation2 + $0x358] sm:$0xff]
    %v172 = vld [vmem:[#allocation2 + $0x360] sm:$0xff]
    %v173 = vld [vmem:[#allocation2 + $0x368] sm:$0xff]
    %v174 = vld [vmem:[#allocation2 + $0x370] sm:$0xff]
    %v175 = vld [vmem:[#allocation2 + $0x378] sm:$0xff]
    %v176 = vld [vmem:[#allocation2 + $0x380] sm:$0xff]
    %v177 = vld [vmem:[#allocation2 + $0x388] sm:$0xff]
    %v178 = vld [vmem:[#allocation2 + $0x390] sm:$0xff]
    %v179 = vld [vmem:[#allocation2 + $0x398] sm:$0xff]
    %v180 = vld [vmem:[#allocation2 + $0x3a0] sm:$0xff]
    %v181 = vld [vmem:[#allocation2 + $0x3a8] sm:$0xff]
    %v182 = vld [vmem:[#allocation2 + $0x3b0] sm:$0xff]
    %v183 = vld [vmem:[#allocation2 + $0x3b8] sm:$0xff]
    %v184 = vld [vmem:[#allocation2 + $0x3c0] sm:$0xff]
    %v185 = vld [vmem:[#allocation2 + $0x3c8] sm:$0xff]
    %v186 = vld [vmem:[#allocation2 + $0x3d0] sm:$0xff]
    %v187 = vld [vmem:[#allocation2 + $0x3d8] sm:$0xff]
    %v188 = vld [vmem:[#allocation2 + $0x3e0] sm:$0xff]
    %v189 = vld [vmem:[#allocation2 + $0x3e8] sm:$0xff]
    %v190 = vld [vmem:[#allocation2 + $0x3f0] sm:$0xff]
    %v191 = vld [vmem:[#allocation2 + $0x3f8] sm:$0xff]
    %v192 = vld [vmem:[#allocation2 + $0x400] sm:$0xff]
    %v193 = vld [vmem:[#allocation2 + $0x408] sm:$0xff]
    %v194 = vld [vmem:[#allocation2 + $0x410] sm:$0xff]
    %v195 = vld [vmem:[#allocation2 + $0x418] sm:$0xff]
    %v196 = vld [vmem:[#allocation2 + $0x420] sm:$0xff]
    %v197 = vld [vmem:[#allocation2 + $0x428] sm:$0xff]
    %v198 = vld [vmem:[#allocation2 + $0x430] sm:$0xff]
    %v199 = vld [vmem:[#allocation2 + $0x438] sm:$0xff]
    %v200 = vld [vmem:[#allocation2 + $0x440] sm:$0xff]
    %v201 = vld [vmem:[#allocation2 + $0x448] sm:$0xff]
    %v202 = vld [vmem:[#allocation2 + $0x450] sm:$0xff]
    %v203 = vld [vmem:[#allocation2 + $0x458] sm:$0xff]
    %v204 = vld [vmem:[#allocation2 + $0x460] sm:$0xff]
    %v205 = vld [vmem:[#allocation2 + $0x468] sm:$0xff]
    %v206 = vld [vmem:[#allocation2 + $0x470] sm:$0xff]
    %v207 = vld [vmem:[#allocation2 + $0x478] sm:$0xff]
    %v208 = vld [vmem:[#allocation2 + $0x480] sm:$0xff]
    %v209 = vld [vmem:[#allocation2 + $0x488] sm:$0xff]
    %v210 = vld [vmem:[#allocation2 + $0x490] sm:$0xff]
    %v211 = vld [vmem:[#allocation2 + $0x498] sm:$0xff]
    %v212 = vld [vmem:[#allocation2 + $0x4a0] sm:$0xff]
    %v213 = vld [vmem:[#allocation2 + $0x4a8] sm:$0xff]
    %v214 = vld [vmem:[#allocation2 + $0x4b0] sm:$0xff]
    %v215 = vld [vmem:[#allocation2 + $0x4b8] sm:$0xff]
    %v216 = vld [vmem:[#allocation2 + $0x4c0] sm:$0xff]
    %v217 = vld [vmem:[#allocation2 + $0x4c8] sm:$0xff]
    %v218 = vld [vmem:[#allocation2 + $0x4d0] sm:$0xff]
    %v219 = vld [vmem:[#allocation2 + $0x4d8] sm:$0xff]
    %v220 = vld [vmem:[#allocation2 + $0x4e0] sm:$0xff]
    %v221 = vld [vmem:[#allocation2 + $0x4e8] sm:$0xff]
    %v222 = vld [vmem:[#allocation2 + $0x4f0] sm:$0xff]
    %v223 = vld [vmem:[#allocation2 + $0x4f8] sm:$0xff]
    %v224 = vld [vmem:[#allocation2 + $0x500] sm:$0xff]
    %v225 = vld [vmem:[#allocation2 + $0x508] sm:$0xff]
    %v226 = vld [vmem:[#allocation2 + $0x510] sm:$0xff]
    %v227 = vld [vmem:[#allocation2 + $0x518] sm:$0xff]
    %v228 = vld [vmem:[#allocation2 + $0x520] sm:$0xff]
    %v229 = vld [vmem:[#allocation2 + $0x528] sm:$0xff]
    %v230 = vld [vmem:[#allocation2 + $0x530] sm:$0xff]
    %v231 = vld [vmem:[#allocation2 + $0x538] sm:$0xff]
    %v232 = vld [vmem:[#allocation2 + $0x540] sm:$0xff]
    %v233 = vld [vmem:[#allocation2 + $0x548] sm:$0xff]
    %v234 = vld [vmem:[#allocation2 + $0x550] sm:$0xff]
    %v235 = vld [vmem:[#allocation2 + $0x558] sm:$0xff]
    %v236 = vld [vmem:[#allocation2 + $0x560] sm:$0xff]
    %v237 = vld [vmem:[#allocation2 + $0x568] sm:$0xff]
    %v238 = vld [vmem:[#allocation2 + $0x570] sm:$0xff]
    %v239 = vld [vmem:[#allocation2 + $0x578] sm:$0xff]
    %v240 = vld [vmem:[#allocation2 + $0x580] sm:$0xff]
    %v241 = vld [vmem:[#allocation2 + $0x588] sm:$0xff]
    %v242 = vld [vmem:[#allocation2 + $0x590] sm:$0xff]
    %v243 = vld [vmem:[#allocation2 + $0x598] sm:$0xff]
    %v244 = vld [vmem:[#allocation2 + $0x5a0] sm:$0xff]
    %v245 = vld [vmem:[#allocation2 + $0x5a8] sm:$0xff]
    %v246 = vld [vmem:[#allocation2 + $0x5b0] sm:$0xff]
    %v247 = vld [vmem:[#allocation2 + $0x5b8] sm:$0xff]
    %v248 = vld [vmem:[#allocation2 + $0x5c0] sm:$0xff]
    %v249 = vld [vmem:[#allocation2 + $0x5c8] sm:$0xff]
    %v250 = vld [vmem:[#allocation2 + $0x5d0] sm:$0xff]
    %v251 = vld [vmem:[#allocation2 + $0x5d8] sm:$0xff]
    %v252 = vld [vmem:[#allocation2 + $0x5e0] sm:$0xff]
    %v253 = vld [vmem:[#allocation2 + $0x5e8] sm:$0xff]
    %v254 = vld [vmem:[#allocation2 + $0x5f0] sm:$0xff]
    %v255 = vld [vmem:[#allocation2 + $0x5f8] sm:$0xff]
    %v256 = vld [vmem:[#allocation2 + $0x600] sm:$0xff]
    %v257 = vld [vmem:[#allocation2 + $0x608] sm:$0xff]
    %v258 = vld [vmem:[#allocation2 + $0x610] sm:$0xff]
    %v259 = vld [vmem:[#allocation2 + $0x618] sm:$0xff]
    %v260 = vld [vmem:[%s2] sm:$0xf]
    %v262 = vlaneseq
    %v263 = vshrl.u32 %v262, 7
    %v264 = vsub.s32 0, %v263
    %v265 = vrot.slane %v260, %v264
    %v266 = vlaneseq
    %v267 = vshrl.u32 %v266, 7
    %v268 = vsub.s32 1, %v267
    %v269 = vrot.slane %v260, %v268
    %v270 = vlaneseq
    %v271 = vshrl.u32 %v270, 7
    %v272 = vsub.s32 2, %v271
    %v273 = vrot.slane %v260, %v272
    %v274 = vlaneseq
    %v275 = vshrl.u32 %v274, 7
    %v276 = vsub.s32 3, %v275
    %v277 = vrot.slane %v260, %v276
    %v290 = vunpack.c.l.b16 %v56
    %v291 = vunpack.c.h.b16 %v56
    %v292 = vunpack.c.l.b16 %v57
    %v293 = vunpack.c.h.b16 %v57
    %v294 = vunpack.c.l.b16 %v58
    %v295 = vunpack.c.h.b16 %v58
    %v296 = vunpack.c.l.b16 %v59
    %v297 = vunpack.c.l.b16 %v60
    %v298 = vunpack.c.h.b16 %v60
    %v299 = vunpack.c.l.b16 %v61
    %v300 = vunpack.c.h.b16 %v61
    %v301 = vunpack.c.l.b16 %v62
    %v302 = vunpack.c.h.b16 %v62
    %v303 = vunpack.c.l.b16 %v63
    %v304 = vpack.c.b16 %v297, %v290
    %v305 = vpack.c.b16 %v298, %v291
    %v306 = vpack.c.b16 %v299, %v292
    %v307 = vpack.c.b16 %v300, %v293
    %v308 = vpack.c.b16 %v301, %v294
    %v309 = vpack.c.b16 %v302, %v295
    %v310 = vpack.c.b16 %v303, %v296
    %v513 = vunpack.c.l.b16 %v64
    %v514 = vunpack.c.h.b16 %v64
    %v515 = vunpack.c.l.b16 %v65
    %v516 = vunpack.c.h.b16 %v65
    %v517 = vunpack.c.l.b16 %v66
    %v518 = vunpack.c.h.b16 %v66
    %v519 = vunpack.c.l.b16 %v67
    %v520 = vunpack.c.h.b16 %v67
    %v521 = vunpack.c.l.b16 %v68
    %v522 = vunpack.c.h.b16 %v68
    %v523 = vunpack.c.l.b16 %v69
    %v524 = vunpack.c.h.b16 %v69
    %v525 = vunpack.c.l.b16 %v70
    %v526 = vunpack.c.h.b16 %v70
    %v527 = vunpack.c.l.b16 %v71
    %v528 = vunpack.c.h.b16 %v71
    %v529 = vunpack.c.l.b16 %v72
    %v530 = vunpack.c.h.b16 %v72
    %v531 = vunpack.c.l.b16 %v73
    %v532 = vunpack.c.h.b16 %v73
    %v533 = vunpack.c.l.b16 %v74
    %v534 = vunpack.c.h.b16 %v74
    %v535 = vunpack.c.l.b16 %v75
    %v536 = vunpack.c.h.b16 %v75
    %v537 = vunpack.c.l.b16 %v76
    %v538 = vunpack.c.h.b16 %v76
    %v539 = vunpack.c.l.b16 %v77
    %v540 = vunpack.c.h.b16 %v77
    %v541 = vunpack.c.l.b16 %v78
    %v542 = vunpack.c.h.b16 %v78
    %v543 = vunpack.c.l.b16 %v79
    %v544 = vunpack.c.h.b16 %v79
    %v545 = vunpack.c.l.b16 %v80
    %v546 = vunpack.c.h.b16 %v80
    %v547 = vunpack.c.l.b16 %v81
    %v548 = vunpack.c.h.b16 %v81
    %v549 = vunpack.c.l.b16 %v82
    %v550 = vunpack.c.h.b16 %v82
    %v551 = vunpack.c.l.b16 %v83
    %v552 = vunpack.c.h.b16 %v83
    %v553 = vunpack.c.l.b16 %v84
    %v554 = vunpack.c.h.b16 %v84
    %v555 = vunpack.c.l.b16 %v85
    %v556 = vunpack.c.h.b16 %v85
    %v557 = vunpack.c.l.b16 %v86
    %v558 = vunpack.c.h.b16 %v86
    %v559 = vunpack.c.l.b16 %v87
    %v560 = vunpack.c.h.b16 %v87
    %v561 = vunpack.c.l.b16 %v88
    %v562 = vunpack.c.h.b16 %v88
    %v563 = vunpack.c.l.b16 %v89
    %v564 = vunpack.c.h.b16 %v89
    %v565 = vunpack.c.l.b16 %v90
    %v566 = vunpack.c.h.b16 %v90
    %v567 = vunpack.c.l.b16 %v91
    %v568 = vunpack.c.h.b16 %v91
    %v569 = vunpack.c.l.b16 %v92
    %v570 = vunpack.c.h.b16 %v92
    %v571 = vunpack.c.l.b16 %v93
    %v572 = vunpack.c.h.b16 %v93
    %v573 = vunpack.c.l.b16 %v94
    %v574 = vunpack.c.h.b16 %v94
    %v575 = vunpack.c.l.b16 %v95
    %v576 = vunpack.c.h.b16 %v95
    %v577 = vunpack.c.l.b16 %v96
    %v578 = vunpack.c.h.b16 %v96
    %v579 = vunpack.c.l.b16 %v97
    %v580 = vunpack.c.h.b16 %v97
    %v581 = vunpack.c.l.b16 %v98
    %v582 = vunpack.c.h.b16 %v98
    %v583 = vunpack.c.l.b16 %v99
    %v584 = vunpack.c.h.b16 %v99
    %v585 = vunpack.c.l.b16 %v100
    %v586 = vunpack.c.h.b16 %v100
    %v587 = vunpack.c.l.b16 %v101
    %v588 = vunpack.c.h.b16 %v101
    %v589 = vunpack.c.l.b16 %v102
    %v590 = vunpack.c.h.b16 %v102
    %v591 = vunpack.c.l.b16 %v103
    %v592 = vunpack.c.h.b16 %v103
    %v593 = vunpack.c.l.b16 %v104
    %v594 = vunpack.c.h.b16 %v104
    %v595 = vunpack.c.l.b16 %v105
    %v596 = vunpack.c.h.b16 %v105
    %v597 = vunpack.c.l.b16 %v106
    %v598 = vunpack.c.h.b16 %v106
    %v599 = vunpack.c.l.b16 %v107
    %v600 = vunpack.c.h.b16 %v107
    %v601 = vunpack.c.l.b16 %v108
    %v602 = vunpack.c.h.b16 %v108
    %v603 = vunpack.c.l.b16 %v109
    %v604 = vunpack.c.h.b16 %v109
    %v605 = vunpack.c.l.b16 %v110
    %v606 = vunpack.c.h.b16 %v110
    %v607 = vunpack.c.l.b16 %v111
    %v608 = vunpack.c.h.b16 %v111
    %v609 = vunpack.c.l.b16 %v112
    %v610 = vunpack.c.h.b16 %v112
    %v611 = vunpack.c.l.b16 %v113
    %v612 = vunpack.c.h.b16 %v113
    %v613 = vunpack.c.l.b16 %v114
    %v614 = vunpack.c.h.b16 %v114
    %v615 = vunpack.c.l.b16 %v115
    %v616 = vunpack.c.h.b16 %v115
    %v617 = vunpack.c.l.b16 %v116
    %v618 = vunpack.c.h.b16 %v116
    %v619 = vunpack.c.l.b16 %v117
    %v620 = vunpack.c.h.b16 %v117
    %v621 = vunpack.c.l.b16 %v118
    %v622 = vunpack.c.h.b16 %v118
    %v623 = vunpack.c.l.b16 %v119
    %v624 = vunpack.c.h.b16 %v119
    %v625 = vunpack.c.l.b16 %v120
    %v626 = vunpack.c.h.b16 %v120
    %v627 = vunpack.c.l.b16 %v121
    %v628 = vunpack.c.h.b16 %v121
    %v629 = vunpack.c.l.b16 %v122
    %v630 = vunpack.c.h.b16 %v122
    %v631 = vunpack.c.l.b16 %v123
    %v632 = vunpack.c.h.b16 %v123
    %v633 = vunpack.c.l.b16 %v124
    %v634 = vunpack.c.h.b16 %v124
    %v635 = vunpack.c.l.b16 %v125
    %v636 = vunpack.c.h.b16 %v125
    %v637 = vunpack.c.l.b16 %v126
    %v638 = vunpack.c.h.b16 %v126
    %v639 = vunpack.c.l.b16 %v127
    %v640 = vunpack.c.h.b16 %v127
    %v641 = vunpack.c.l.b16 %v128
    %v642 = vunpack.c.h.b16 %v128
    %v643 = vunpack.c.l.b16 %v129
    %v644 = vunpack.c.h.b16 %v129
    %v645 = vunpack.c.l.b16 %v130
    %v646 = vunpack.c.h.b16 %v130
    %v647 = vunpack.c.l.b16 %v131
    %v648 = vunpack.c.h.b16 %v131
    %v649 = vunpack.c.l.b16 %v132
    %v650 = vunpack.c.h.b16 %v132
    %v651 = vunpack.c.l.b16 %v133
    %v652 = vunpack.c.h.b16 %v133
    %v653 = vunpack.c.l.b16 %v134
    %v654 = vunpack.c.h.b16 %v134
    %v655 = vunpack.c.l.b16 %v135
    %v656 = vunpack.c.h.b16 %v135
    %v657 = vunpack.c.l.b16 %v136
    %v658 = vunpack.c.h.b16 %v136
    %v659 = vunpack.c.l.b16 %v137
    %v660 = vunpack.c.h.b16 %v137
    %v661 = vunpack.c.l.b16 %v138
    %v662 = vunpack.c.h.b16 %v138
    %v663 = vunpack.c.l.b16 %v139
    %v664 = vunpack.c.h.b16 %v139
    %v665 = vunpack.c.l.b16 %v140
    %v666 = vunpack.c.h.b16 %v140
    %v667 = vunpack.c.l.b16 %v141
    %v668 = vunpack.c.h.b16 %v141
    %v669 = vunpack.c.l.b16 %v142
    %v670 = vunpack.c.h.b16 %v142
    %v671 = vunpack.c.l.b16 %v143
    %v672 = vunpack.c.h.b16 %v143
    %v673 = vunpack.c.l.b16 %v144
    %v674 = vunpack.c.h.b16 %v144
    %v675 = vunpack.c.l.b16 %v145
    %v676 = vunpack.c.h.b16 %v145
    %v677 = vunpack.c.l.b16 %v146
    %v678 = vunpack.c.h.b16 %v146
    %v679 = vunpack.c.l.b16 %v147
    %v680 = vunpack.c.h.b16 %v147
    %v681 = vunpack.c.l.b16 %v148
    %v682 = vunpack.c.h.b16 %v148
    %v683 = vunpack.c.l.b16 %v149
    %v684 = vunpack.c.h.b16 %v149
    %v685 = vunpack.c.l.b16 %v150
    %v686 = vunpack.c.h.b16 %v150
    %v687 = vunpack.c.l.b16 %v151
    %v688 = vunpack.c.h.b16 %v151
    %v689 = vunpack.c.l.b16 %v152
    %v690 = vunpack.c.h.b16 %v152
    %v691 = vunpack.c.l.b16 %v153
    %v692 = vunpack.c.h.b16 %v153
    %v693 = vunpack.c.l.b16 %v154
    %v694 = vunpack.c.h.b16 %v154
    %v695 = vunpack.c.l.b16 %v155
    %v696 = vunpack.c.h.b16 %v155
    %v697 = vunpack.c.l.b16 %v156
    %v698 = vunpack.c.h.b16 %v156
    %v699 = vunpack.c.l.b16 %v157
    %v700 = vunpack.c.h.b16 %v157
    %v701 = vunpack.c.l.b16 %v158
    %v702 = vunpack.c.h.b16 %v158
    %v703 = vunpack.c.l.b16 %v159
    %v704 = vunpack.c.h.b16 %v159
    %v705 = vunpack.c.l.b16 %v160
    %v706 = vunpack.c.h.b16 %v160
    %v707 = vunpack.c.l.b16 %v161
    %v708 = vunpack.c.h.b16 %v161
    %v709 = vunpack.c.l.b16 %v162
    %v710 = vunpack.c.h.b16 %v162
    %v711 = vunpack.c.l.b16 %v163
    %v712 = vunpack.c.h.b16 %v163
    %v713 = vunpack.c.l.b16 %v164
    %v714 = vunpack.c.h.b16 %v164
    %v715 = vunpack.c.l.b16 %v165
    %v716 = vunpack.c.h.b16 %v165
    %v717 = vunpack.c.l.b16 %v166
    %v718 = vunpack.c.h.b16 %v166
    %v719 = vunpack.c.l.b16 %v167
    %v720 = vunpack.c.h.b16 %v167
    %v721 = vunpack.c.l.b16 %v168
    %v722 = vunpack.c.h.b16 %v168
    %v723 = vunpack.c.l.b16 %v169
    %v724 = vunpack.c.h.b16 %v169
    %v725 = vunpack.c.l.b16 %v170
    %v726 = vunpack.c.h.b16 %v170
    %v727 = vunpack.c.l.b16 %v171
    %v728 = vunpack.c.h.b16 %v171
    %v729 = vunpack.c.l.b16 %v172
    %v730 = vunpack.c.h.b16 %v172
    %v731 = vunpack.c.l.b16 %v173
    %v732 = vunpack.c.h.b16 %v173
    %v733 = vunpack.c.l.b16 %v174
    %v734 = vunpack.c.h.b16 %v174
    %v735 = vunpack.c.l.b16 %v175
    %v736 = vunpack.c.h.b16 %v175
    %v737 = vunpack.c.l.b16 %v176
    %v738 = vunpack.c.h.b16 %v176
    %v739 = vunpack.c.l.b16 %v177
    %v740 = vunpack.c.h.b16 %v177
    %v741 = vunpack.c.l.b16 %v178
    %v742 = vunpack.c.h.b16 %v178
    %v743 = vunpack.c.l.b16 %v179
    %v744 = vunpack.c.h.b16 %v179
    %v745 = vunpack.c.l.b16 %v180
    %v746 = vunpack.c.h.b16 %v180
    %v747 = vunpack.c.l.b16 %v181
    %v748 = vunpack.c.h.b16 %v181
    %v749 = vunpack.c.l.b16 %v182
    %v750 = vunpack.c.h.b16 %v182
    %v751 = vunpack.c.l.b16 %v183
    %v752 = vunpack.c.h.b16 %v183
    %v753 = vunpack.c.l.b16 %v184
    %v754 = vunpack.c.h.b16 %v184
    %v755 = vunpack.c.l.b16 %v185
    %v756 = vunpack.c.h.b16 %v185
    %v757 = vunpack.c.l.b16 %v186
    %v758 = vunpack.c.h.b16 %v186
    %v759 = vunpack.c.l.b16 %v187
    %v760 = vunpack.c.h.b16 %v187
    %v761 = vunpack.c.l.b16 %v188
    %v762 = vunpack.c.h.b16 %v188
    %v763 = vunpack.c.l.b16 %v189
    %v764 = vunpack.c.h.b16 %v189
    %v765 = vunpack.c.l.b16 %v190
    %v766 = vunpack.c.h.b16 %v190
    %v767 = vunpack.c.l.b16 %v191
    %v768 = vunpack.c.h.b16 %v191
    %v769 = vunpack.c.l.b16 %v192
    %v770 = vunpack.c.h.b16 %v192
    %v771 = vunpack.c.l.b16 %v193
    %v772 = vunpack.c.h.b16 %v193
    %v773 = vunpack.c.l.b16 %v194
    %v774 = vunpack.c.h.b16 %v194
    %v775 = vunpack.c.l.b16 %v195
    %v776 = vunpack.c.h.b16 %v195
    %v777 = vunpack.c.l.b16 %v196
    %v778 = vunpack.c.h.b16 %v196
    %v779 = vunpack.c.l.b16 %v197
    %v780 = vunpack.c.h.b16 %v197
    %v781 = vunpack.c.l.b16 %v198
    %v782 = vunpack.c.h.b16 %v198
    %v783 = vunpack.c.l.b16 %v199
    %v784 = vunpack.c.h.b16 %v199
    %v785 = vunpack.c.l.b16 %v200
    %v786 = vunpack.c.h.b16 %v200
    %v787 = vunpack.c.l.b16 %v201
    %v788 = vunpack.c.h.b16 %v201
    %v789 = vunpack.c.l.b16 %v202
    %v790 = vunpack.c.h.b16 %v202
    %v791 = vunpack.c.l.b16 %v203
    %v792 = vunpack.c.h.b16 %v203
    %v793 = vunpack.c.l.b16 %v204
    %v794 = vunpack.c.h.b16 %v204
    %v795 = vunpack.c.l.b16 %v205
    %v796 = vunpack.c.h.b16 %v205
    %v797 = vunpack.c.l.b16 %v206
    %v798 = vunpack.c.h.b16 %v206
    %v799 = vunpack.c.l.b16 %v207
    %v800 = vunpack.c.h.b16 %v207
    %v801 = vunpack.c.l.b16 %v208
    %v802 = vunpack.c.h.b16 %v208
    %v803 = vunpack.c.l.b16 %v209
    %v804 = vunpack.c.h.b16 %v209
    %v805 = vunpack.c.l.b16 %v210
    %v806 = vunpack.c.h.b16 %v210
    %v807 = vunpack.c.l.b16 %v211
    %v808 = vunpack.c.h.b16 %v211
    %v809 = vunpack.c.l.b16 %v212
    %v810 = vunpack.c.h.b16 %v212
    %v811 = vunpack.c.l.b16 %v213
    %v812 = vunpack.c.h.b16 %v213
    %v813 = vunpack.c.l.b16 %v214
    %v814 = vunpack.c.h.b16 %v214
    %v815 = vunpack.c.l.b16 %v215
    %v816 = vunpack.c.h.b16 %v215
    %v817 = vunpack.c.l.b16 %v216
    %v818 = vunpack.c.h.b16 %v216
    %v819 = vunpack.c.l.b16 %v217
    %v820 = vunpack.c.h.b16 %v217
    %v821 = vunpack.c.l.b16 %v218
    %v822 = vunpack.c.h.b16 %v218
    %v823 = vunpack.c.l.b16 %v219
    %v824 = vunpack.c.h.b16 %v219
    %v825 = vunpack.c.l.b16 %v220
    %v826 = vunpack.c.h.b16 %v220
    %v827 = vunpack.c.l.b16 %v221
    %v828 = vunpack.c.h.b16 %v221
    %v829 = vunpack.c.l.b16 %v222
    %v830 = vunpack.c.h.b16 %v222
    %v831 = vunpack.c.l.b16 %v223
    %v832 = vunpack.c.h.b16 %v223
    %v833 = vunpack.c.l.b16 %v224
    %v834 = vunpack.c.h.b16 %v224
    %v835 = vunpack.c.l.b16 %v225
    %v836 = vunpack.c.h.b16 %v225
    %v837 = vunpack.c.l.b16 %v226
    %v838 = vunpack.c.h.b16 %v226
    %v839 = vunpack.c.l.b16 %v227
    %v840 = vunpack.c.h.b16 %v227
    %v841 = vunpack.c.l.b16 %v228
    %v842 = vunpack.c.h.b16 %v228
    %v843 = vunpack.c.l.b16 %v229
    %v844 = vunpack.c.h.b16 %v229
    %v845 = vunpack.c.l.b16 %v230
    %v846 = vunpack.c.h.b16 %v230
    %v847 = vunpack.c.l.b16 %v231
    %v848 = vunpack.c.h.b16 %v231
    %v849 = vunpack.c.l.b16 %v232
    %v850 = vunpack.c.h.b16 %v232
    %v851 = vunpack.c.l.b16 %v233
    %v852 = vunpack.c.h.b16 %v233
    %v853 = vunpack.c.l.b16 %v234
    %v854 = vunpack.c.h.b16 %v234
    %v855 = vunpack.c.l.b16 %v235
    %v856 = vunpack.c.h.b16 %v235
    %v857 = vunpack.c.l.b16 %v236
    %v858 = vunpack.c.h.b16 %v236
    %v859 = vunpack.c.l.b16 %v237
    %v860 = vunpack.c.h.b16 %v237
    %v861 = vunpack.c.l.b16 %v238
    %v862 = vunpack.c.h.b16 %v238
    %v863 = vunpack.c.l.b16 %v239
    %v864 = vunpack.c.h.b16 %v239
    %v865 = vunpack.c.l.b16 %v240
    %v866 = vunpack.c.h.b16 %v240
    %v867 = vunpack.c.l.b16 %v241
    %v868 = vunpack.c.h.b16 %v241
    %v869 = vunpack.c.l.b16 %v242
    %v870 = vunpack.c.h.b16 %v242
    %v871 = vunpack.c.l.b16 %v243
    %v872 = vunpack.c.h.b16 %v243
    %v873 = vunpack.c.l.b16 %v244
    %v874 = vunpack.c.h.b16 %v244
    %v875 = vunpack.c.l.b16 %v245
    %v876 = vunpack.c.h.b16 %v245
    %v877 = vunpack.c.l.b16 %v246
    %v878 = vunpack.c.h.b16 %v246
    %v879 = vunpack.c.l.b16 %v247
    %v880 = vunpack.c.h.b16 %v247
    %v881 = vunpack.c.l.b16 %v248
    %v882 = vunpack.c.h.b16 %v248
    %v883 = vunpack.c.l.b16 %v249
    %v884 = vunpack.c.h.b16 %v249
    %v885 = vunpack.c.l.b16 %v250
    %v886 = vunpack.c.h.b16 %v250
    %v887 = vunpack.c.l.b16 %v251
    %v888 = vunpack.c.h.b16 %v251
    %v889 = vunpack.c.l.b16 %v252
    %v890 = vunpack.c.h.b16 %v252
    %v891 = vunpack.c.l.b16 %v253
    %v892 = vunpack.c.h.b16 %v253
    %v893 = vunpack.c.l.b16 %v254
    %v894 = vunpack.c.h.b16 %v254
    %v895 = vunpack.c.l.b16 %v255
    %v896 = vunpack.c.h.b16 %v255
    %v897 = vunpack.c.l.b16 %v256
    %v898 = vunpack.c.h.b16 %v256
    %v899 = vunpack.c.l.b16 %v257
    %v900 = vunpack.c.h.b16 %v257
    %v901 = vunpack.c.l.b16 %v258
    %v902 = vunpack.c.h.b16 %v258
    %v903 = vunpack.c.l.b16 %v259
    %v904 = vunpack.c.h.b16 %v259
    %v905 = vpack.c.b16 %v517, %v513
    %v906 = vpack.c.b16 %v518, %v514
    %v907 = vpack.c.b16 %v519, %v515
    %v908 = vpack.c.b16 %v520, %v516
    %v909 = vpack.c.b16 %v525, %v521
    %v910 = vpack.c.b16 %v526, %v522
    %v911 = vpack.c.b16 %v527, %v523
    %v912 = vpack.c.b16 %v528, %v524
    %v913 = vpack.c.b16 %v533, %v529
    %v914 = vpack.c.b16 %v534, %v530
    %v915 = vpack.c.b16 %v535, %v531
    %v916 = vpack.c.b16 %v536, %v532
    %v917 = vpack.c.b16 %v541, %v537
    %v918 = vpack.c.b16 %v542, %v538
    %v919 = vpack.c.b16 %v543, %v539
    %v920 = vpack.c.b16 %v544, %v540
    %v921 = vpack.c.b16 %v549, %v545
    %v922 = vpack.c.b16 %v550, %v546
    %v923 = vpack.c.b16 %v551, %v547
    %v924 = vpack.c.b16 %v552, %v548
    %v925 = vpack.c.b16 %v557, %v553
    %v926 = vpack.c.b16 %v558, %v554
    %v927 = vpack.c.b16 %v559, %v555
    %v928 = vpack.c.b16 %v560, %v556
    %v929 = vpack.c.b16 %v565, %v561
    %v930 = vpack.c.b16 %v566, %v562
    %v931 = vpack.c.b16 %v567, %v563
    %v932 = vpack.c.b16 %v568, %v564
    %v933 = vpack.c.b16 %v573, %v569
    %v934 = vpack.c.b16 %v574, %v570
    %v935 = vpack.c.b16 %v575, %v571
    %v936 = vpack.c.b16 %v576, %v572
    %v937 = vpack.c.b16 %v581, %v577
    %v938 = vpack.c.b16 %v582, %v578
    %v939 = vpack.c.b16 %v583, %v579
    %v940 = vpack.c.b16 %v584, %v580
    %v941 = vpack.c.b16 %v589, %v585
    %v942 = vpack.c.b16 %v590, %v586
    %v943 = vpack.c.b16 %v591, %v587
    %v944 = vpack.c.b16 %v592, %v588
    %v945 = vpack.c.b16 %v597, %v593
    %v946 = vpack.c.b16 %v598, %v594
    %v947 = vpack.c.b16 %v599, %v595
    %v948 = vpack.c.b16 %v600, %v596
    %v949 = vpack.c.b16 %v605, %v601
    %v950 = vpack.c.b16 %v606, %v602
    %v951 = vpack.c.b16 %v607, %v603
    %v952 = vpack.c.b16 %v608, %v604
    %v953 = vpack.c.b16 %v613, %v609
    %v954 = vpack.c.b16 %v614, %v610
    %v955 = vpack.c.b16 %v615, %v611
    %v956 = vpack.c.b16 %v616, %v612
    %v957 = vpack.c.b16 %v621, %v617
    %v958 = vpack.c.b16 %v622, %v618
    %v959 = vpack.c.b16 %v623, %v619
    %v960 = vpack.c.b16 %v624, %v620
    %v961 = vpack.c.b16 %v629, %v625
    %v962 = vpack.c.b16 %v630, %v626
    %v963 = vpack.c.b16 %v631, %v627
    %v964 = vpack.c.b16 %v632, %v628
    %v965 = vpack.c.b16 %v637, %v633
    %v966 = vpack.c.b16 %v638, %v634
    %v967 = vpack.c.b16 %v639, %v635
    %v968 = vpack.c.b16 %v640, %v636
    %v969 = vpack.c.b16 %v645, %v641
    %v970 = vpack.c.b16 %v646, %v642
    %v971 = vpack.c.b16 %v647, %v643
    %v972 = vpack.c.b16 %v648, %v644
    %v973 = vpack.c.b16 %v653, %v649
    %v974 = vpack.c.b16 %v654, %v650
    %v975 = vpack.c.b16 %v655, %v651
    %v976 = vpack.c.b16 %v656, %v652
    %v977 = vpack.c.b16 %v661, %v657
    %v978 = vpack.c.b16 %v662, %v658
    %v979 = vpack.c.b16 %v663, %v659
    %v980 = vpack.c.b16 %v664, %v660
    %v981 = vpack.c.b16 %v669, %v665
    %v982 = vpack.c.b16 %v670, %v666
    %v983 = vpack.c.b16 %v671, %v667
    %v984 = vpack.c.b16 %v672, %v668
    %v985 = vpack.c.b16 %v677, %v673
    %v986 = vpack.c.b16 %v678, %v674
    %v987 = vpack.c.b16 %v679, %v675
    %v988 = vpack.c.b16 %v680, %v676
    %v989 = vpack.c.b16 %v685, %v681
    %v990 = vpack.c.b16 %v686, %v682
    %v991 = vpack.c.b16 %v687, %v683
    %v992 = vpack.c.b16 %v688, %v684
    %v993 = vpack.c.b16 %v693, %v689
    %v994 = vpack.c.b16 %v694, %v690
    %v995 = vpack.c.b16 %v695, %v691
    %v996 = vpack.c.b16 %v696, %v692
    %v997 = vpack.c.b16 %v701, %v697
    %v998 = vpack.c.b16 %v702, %v698
    %v999 = vpack.c.b16 %v703, %v699
    %v1000 = vpack.c.b16 %v704, %v700
    %v1001 = vpack.c.b16 %v709, %v705
    %v1002 = vpack.c.b16 %v710, %v706
    %v1003 = vpack.c.b16 %v711, %v707
    %v1004 = vpack.c.b16 %v712, %v708
    %v1005 = vpack.c.b16 %v717, %v713
    %v1006 = vpack.c.b16 %v718, %v714
    %v1007 = vpack.c.b16 %v719, %v715
    %v1008 = vpack.c.b16 %v720, %v716
    %v1009 = vpack.c.b16 %v725, %v721
    %v1010 = vpack.c.b16 %v726, %v722
    %v1011 = vpack.c.b16 %v727, %v723
    %v1012 = vpack.c.b16 %v728, %v724
    %v1013 = vpack.c.b16 %v733, %v729
    %v1014 = vpack.c.b16 %v734, %v730
    %v1015 = vpack.c.b16 %v735, %v731
    %v1016 = vpack.c.b16 %v736, %v732
    %v1017 = vpack.c.b16 %v741, %v737
    %v1018 = vpack.c.b16 %v742, %v738
    %v1019 = vpack.c.b16 %v743, %v739
    %v1020 = vpack.c.b16 %v744, %v740
    %v1021 = vpack.c.b16 %v749, %v745
    %v1022 = vpack.c.b16 %v750, %v746
    %v1023 = vpack.c.b16 %v751, %v747
    %v1024 = vpack.c.b16 %v752, %v748
    %v1025 = vpack.c.b16 %v757, %v753
    %v1026 = vpack.c.b16 %v758, %v754
    %v1027 = vpack.c.b16 %v759, %v755
    %v1028 = vpack.c.b16 %v760, %v756
    %v1029 = vpack.c.b16 %v765, %v761
    %v1030 = vpack.c.b16 %v766, %v762
    %v1031 = vpack.c.b16 %v767, %v763
    %v1032 = vpack.c.b16 %v768, %v764
    %v1033 = vpack.c.b16 %v773, %v769
    %v1034 = vpack.c.b16 %v774, %v770
    %v1035 = vpack.c.b16 %v775, %v771
    %v1036 = vpack.c.b16 %v776, %v772
    %v1037 = vpack.c.b16 %v781, %v777
    %v1038 = vpack.c.b16 %v782, %v778
    %v1039 = vpack.c.b16 %v783, %v779
    %v1040 = vpack.c.b16 %v784, %v780
    %v1041 = vpack.c.b16 %v789, %v785
    %v1042 = vpack.c.b16 %v790, %v786
    %v1043 = vpack.c.b16 %v791, %v787
    %v1044 = vpack.c.b16 %v792, %v788
    %v1045 = vpack.c.b16 %v797, %v793
    %v1046 = vpack.c.b16 %v798, %v794
    %v1047 = vpack.c.b16 %v799, %v795
    %v1048 = vpack.c.b16 %v800, %v796
    %v1049 = vpack.c.b16 %v805, %v801
    %v1050 = vpack.c.b16 %v806, %v802
    %v1051 = vpack.c.b16 %v807, %v803
    %v1052 = vpack.c.b16 %v808, %v804
    %v1053 = vpack.c.b16 %v813, %v809
    %v1054 = vpack.c.b16 %v814, %v810
    %v1055 = vpack.c.b16 %v815, %v811
    %v1056 = vpack.c.b16 %v816, %v812
    %v1057 = vpack.c.b16 %v821, %v817
    %v1058 = vpack.c.b16 %v822, %v818
    %v1059 = vpack.c.b16 %v823, %v819
    %v1060 = vpack.c.b16 %v824, %v820
    %v1061 = vpack.c.b16 %v829, %v825
    %v1062 = vpack.c.b16 %v830, %v826
    %v1063 = vpack.c.b16 %v831, %v827
    %v1064 = vpack.c.b16 %v832, %v828
    %v1065 = vpack.c.b16 %v837, %v833
    %v1066 = vpack.c.b16 %v838, %v834
    %v1067 = vpack.c.b16 %v839, %v835
    %v1068 = vpack.c.b16 %v840, %v836
    %v1069 = vpack.c.b16 %v845, %v841
    %v1070 = vpack.c.b16 %v846, %v842
    %v1071 = vpack.c.b16 %v847, %v843
    %v1072 = vpack.c.b16 %v848, %v844
    %v1073 = vpack.c.b16 %v853, %v849
    %v1074 = vpack.c.b16 %v854, %v850
    %v1075 = vpack.c.b16 %v855, %v851
    %v1076 = vpack.c.b16 %v856, %v852
    %v1077 = vpack.c.b16 %v861, %v857
    %v1078 = vpack.c.b16 %v862, %v858
    %v1079 = vpack.c.b16 %v863, %v859
    %v1080 = vpack.c.b16 %v864, %v860
    %v1081 = vpack.c.b16 %v869, %v865
    %v1082 = vpack.c.b16 %v870, %v866
    %v1083 = vpack.c.b16 %v871, %v867
    %v1084 = vpack.c.b16 %v872, %v868
    %v1085 = vpack.c.b16 %v877, %v873
    %v1086 = vpack.c.b16 %v878, %v874
    %v1087 = vpack.c.b16 %v879, %v875
    %v1088 = vpack.c.b16 %v880, %v876
    %v1089 = vpack.c.b16 %v885, %v881
    %v1090 = vpack.c.b16 %v886, %v882
    %v1091 = vpack.c.b16 %v887, %v883
    %v1092 = vpack.c.b16 %v888, %v884
    %v1093 = vpack.c.b16 %v893, %v889
    %v1094 = vpack.c.b16 %v894, %v890
    %v1095 = vpack.c.b16 %v895, %v891
    %v1096 = vpack.c.b16 %v896, %v892
    %v1097 = vpack.c.b16 %v901, %v897
    %v1098 = vpack.c.b16 %v902, %v898
    %v1099 = vpack.c.b16 %v903, %v899
    %v1100 = vpack.c.b16 %v904, %v900
    %vm1297 = vcmask 130048
    %v1299 = vsel %vm1297, %v310, 0
    %1301 = vmatprep.subr.bf16.mxu0 %v934
    %1302 = vmatpush1.bf16.msra.mxu0 %v933
    %1303 = vmatprep.subr.bf16.mxu0 %v930
    %1304 = vmatpush1.bf16.msra.mxu0 %v929
    %1305 = vmatprep.subr.bf16.mxu0 %v926
    %1306 = vmatpush1.bf16.msra.mxu0 %v925
    %1307 = vmatprep.subr.bf16.mxu0 %v922
    %1308 = vmatpush1.bf16.msra.mxu0 %v921
    %1309 = vmatprep.subr.bf16.mxu0 %v918
    %1310 = vmatpush1.bf16.msra.mxu0 %v917
    %1311 = vmatprep.subr.bf16.mxu0 %v914
    %1312 = vmatpush1.bf16.msra.mxu0 %v913
    %1313 = vmatprep.subr.bf16.mxu0 %v910
    %1314 = vmatpush1.bf16.msra.mxu0 %v909
    %1315 = vmatprep.subr.bf16.mxu0 %v906
    %1316 = vmatpush1.bf16.msra.mxu0 %v905
    %1317 = vmatprep.subr.bf16.mxu0 %v966
    %1318 = vmatpush2.bf16.msra.mxu0 %v965
    %1319 = vmatprep.subr.bf16.mxu0 %v962
    %1320 = vmatpush2.bf16.msra.mxu0 %v961
    %1321 = vmatprep.subr.bf16.mxu0 %v958
    %1322 = vmatpush2.bf16.msra.mxu0 %v957
    %1323 = vmatprep.subr.bf16.mxu0 %v954
    %1324 = vmatpush2.bf16.msra.mxu0 %v953
    %1325 = vmatprep.subr.bf16.mxu0 %v950
    %1326 = vmatpush2.bf16.msra.mxu0 %v949
    %1327 = vmatprep.subr.bf16.mxu0 %v946
    %1328 = vmatpush2.bf16.msra.mxu0 %v945
    %1329 = vmatprep.subr.bf16.mxu0 %v942
    %1330 = vmatpush2.bf16.msra.mxu0 %v941
    %1331 = vmatprep.subr.bf16.mxu0 %v938
    %1332 = vmatpush2.bf16.msra.mxu0 %v937
    %1333 = vmatprep.mubr.bf16.mxu0 %v305
    %1334 = vmatmul.mubr.bf16.gmra.mxu0 %v304
    %v1335 = vpop.f32.mrf.mxu0
    %v1336 = vadd.f32 %v265, %v1335
    %v1337 = vpop.f32.mrf.mxu0
    %v1338 = vadd.f32 %v269, %v1337
    %v1339 = vpop.f32.mrf.mxu0
    %v1340 = vadd.f32 %v265, %v1339
    %v1341 = vpop.f32.mrf.mxu0
    %v1342 = vadd.f32 %v269, %v1341
    %1343 = vdwg.mxu0
    %1344 = vmatprep.subr.bf16.mxu0 %v998
    %1345 = vmatpush1.bf16.msra.mxu0 %v997
    %1346 = vmatprep.subr.bf16.mxu0 %v994
    %1347 = vmatpush1.bf16.msra.mxu0 %v993
    %1348 = vmatprep.subr.bf16.mxu0 %v990
    %1349 = vmatpush1.bf16.msra.mxu0 %v989
    %1350 = vmatprep.subr.bf16.mxu0 %v986
    %1351 = vmatpush1.bf16.msra.mxu0 %v985
    %1352 = vmatprep.subr.bf16.mxu0 %v982
    %1353 = vmatpush1.bf16.msra.mxu0 %v981
    %1354 = vmatprep.subr.bf16.mxu0 %v978
    %1355 = vmatpush1.bf16.msra.mxu0 %v977
    %1356 = vmatprep.subr.bf16.mxu0 %v974
    %1357 = vmatpush1.bf16.msra.mxu0 %v973
    %1358 = vmatprep.subr.bf16.mxu0 %v970
    %1359 = vmatpush1.bf16.msra.mxu0 %v969
    %1360 = vmatprep.subr.bf16.mxu0 %v1030
    %1361 = vmatpush2.bf16.msra.mxu0 %v1029
    %1362 = vmatprep.subr.bf16.mxu0 %v1026
    %1363 = vmatpush2.bf16.msra.mxu0 %v1025
    %1364 = vmatprep.subr.bf16.mxu0 %v1022
    %1365 = vmatpush2.bf16.msra.mxu0 %v1021
    %1366 = vmatprep.subr.bf16.mxu0 %v1018
    %1367 = vmatpush2.bf16.msra.mxu0 %v1017
    %1368 = vmatprep.subr.bf16.mxu0 %v1014
    %1369 = vmatpush2.bf16.msra.mxu0 %v1013
    %1370 = vmatprep.subr.bf16.mxu0 %v1010
    %1371 = vmatpush2.bf16.msra.mxu0 %v1009
    %1372 = vmatprep.subr.bf16.mxu0 %v1006
    %1373 = vmatpush2.bf16.msra.mxu0 %v1005
    %1374 = vmatprep.subr.bf16.mxu0 %v1002
    %1375 = vmatpush2.bf16.msra.mxu0 %v1001
    %1376 = vmatprep.mubr.bf16.mxu0 %v307
    %1377 = vmatmul.mubr.bf16.gmra.mxu0 %v306
    %v1378 = vpop.f32.mrf.mxu0
    %v1379 = vadd.f32 %v1336, %v1378
    %v1380 = vpop.f32.mrf.mxu0
    %v1381 = vadd.f32 %v1338, %v1380
    %v1382 = vpop.f32.mrf.mxu0
    %v1383 = vadd.f32 %v1340, %v1382
    %v1384 = vpop.f32.mrf.mxu0
    %v1385 = vadd.f32 %v1342, %v1384
    %1386 = vdwg.mxu0
    %1387 = vmatprep.subr.bf16.mxu0 %v1062
    %1388 = vmatpush1.bf16.msra.mxu0 %v1061
    %1389 = vmatprep.subr.bf16.mxu0 %v1058
    %1390 = vmatpush1.bf16.msra.mxu0 %v1057
    %1391 = vmatprep.subr.bf16.mxu0 %v1054
    %1392 = vmatpush1.bf16.msra.mxu0 %v1053
    %1393 = vmatprep.subr.bf16.mxu0 %v1050
    %1394 = vmatpush1.bf16.msra.mxu0 %v1049
    %1395 = vmatprep.subr.bf16.mxu0 %v1046
    %1396 = vmatpush1.bf16.msra.mxu0 %v1045
    %1397 = vmatprep.subr.bf16.mxu0 %v1042
    %1398 = vmatpush1.bf16.msra.mxu0 %v1041
    %1399 = vmatprep.subr.bf16.mxu0 %v1038
    %1400 = vmatpush1.bf16.msra.mxu0 %v1037
    %1401 = vmatprep.subr.bf16.mxu0 %v1034
    %1402 = vmatpush1.bf16.msra.mxu0 %v1033
    %1403 = vmatprep.subr.bf16.mxu0 %v1094
    %1404 = vmatpush2.bf16.msra.mxu0 %v1093
    %1405 = vmatprep.subr.bf16.mxu0 %v1090
    %1406 = vmatpush2.bf16.msra.mxu0 %v1089
    %1407 = vmatprep.subr.bf16.mxu0 %v1086
    %1408 = vmatpush2.bf16.msra.mxu0 %v1085
    %1409 = vmatprep.subr.bf16.mxu0 %v1082
    %1410 = vmatpush2.bf16.msra.mxu0 %v1081
    %1411 = vmatprep.subr.bf16.mxu0 %v1078
    %1412 = vmatpush2.bf16.msra.mxu0 %v1077
    %1413 = vmatprep.subr.bf16.mxu0 %v1074
    %1414 = vmatpush2.bf16.msra.mxu0 %v1073
    %1415 = vmatprep.subr.bf16.mxu0 %v1070
    %1416 = vmatpush2.bf16.msra.mxu0 %v1069
    %1417 = vmatprep.subr.bf16.mxu0 %v1066
    %1418 = vmatpush2.bf16.msra.mxu0 %v1065
    %1419 = vmatprep.mubr.bf16.mxu0 %v309
    %1420 = vmatmul.mubr.bf16.gmra.mxu0 %v308
    %v1421 = vpop.f32.mrf.mxu0
    %v1422 = vadd.f32 %v1379, %v1421
    %v1423 = vpop.f32.mrf.mxu0
    %v1424 = vadd.f32 %v1381, %v1423
    %v1425 = vpop.f32.mrf.mxu0
    %v1426 = vadd.f32 %v1383, %v1425
    %v1427 = vpop.f32.mrf.mxu0
    %v1428 = vadd.f32 %v1385, %v1427
    %1429 = vdwg.mxu0
    %1430 = vmatprep.subr.bf16.mxu0 0
    %1431 = vmatpush1.bf16.msra.mxu0 0
    %1432 = vmatprep.subr.bf16.mxu0 0
    %1433 = vmatpush1.bf16.msra.mxu0 0
    %1434 = vmatprep.subr.bf16.mxu0 0
    %1435 = vmatpush1.bf16.msra.mxu0 0
    %1436 = vmatprep.subr.bf16.mxu0 0
    %1437 = vmatpush1.bf16.msra.mxu0 0
    %1438 = vmatprep.subr.bf16.mxu0 0
    %1439 = vmatpush1.bf16.msra.mxu0 0
    %1440 = vmatprep.subr.bf16.mxu0 0
    %1441 = vmatpush1.bf16.msra.mxu0 0
    %1442 = vmatprep.subr.bf16.mxu0 0
    %1443 = vmatpush1.bf16.msra.mxu0 0
    %1444 = vmatprep.subr.bf16.mxu0 %v1098
    %1445 = vmatpush1.bf16.msra.mxu0 %v1097
    %1446 = vmatprep.subr.bf16.mxu0 0
    %1447 = vmatpush2.bf16.msra.mxu0 0
    %1448 = vmatprep.subr.bf16.mxu0 0
    %1449 = vmatpush2.bf16.msra.mxu0 0
    %1450 = vmatprep.subr.bf16.mxu0 0
    %1451 = vmatpush2.bf16.msra.mxu0 0
    %1452 = vmatprep.subr.bf16.mxu0 0
    %1453 = vmatpush2.bf16.msra.mxu0 0
    %1454 = vmatprep.subr.bf16.mxu0 0
    %1455 = vmatpush2.bf16.msra.mxu0 0
    %1456 = vmatprep.subr.bf16.mxu0 0
    %1457 = vmatpush2.bf16.msra.mxu0 0
    %1458 = vmatprep.subr.bf16.mxu0 0
    %1459 = vmatpush2.bf16.msra.mxu0 0
    %1460 = vmatprep.subr.bf16.mxu0 0
    %1461 = vmatpush2.bf16.msra.mxu0 0
    %1462 = vmatprep.mubr.bf16.mxu0 0
    %1463 = vmatmul.mubr.bf16.gmra.mxu0 %v1299
    %v1464 = vpop.f32.mrf.mxu0
    %v1465 = vadd.f32 %v1422, %v1464
    %v1466 = vpop.f32.mrf.mxu0
    %v1467 = vadd.f32 %v1424, %v1466
    %v1468 = vpop.f32.mrf.mxu0
    %v1469 = vadd.f32 %v1426, %v1468
    %v1470 = vpop.f32.mrf.mxu0
    %v1471 = vadd.f32 %v1428, %v1470
    %1472 = vdwg.mxu0
    %1473 = vmatprep.subr.bf16.mxu0 %v936
    %1474 = vmatpush1.bf16.msra.mxu0 %v935
    %1475 = vmatprep.subr.bf16.mxu0 %v932
    %1476 = vmatpush1.bf16.msra.mxu0 %v931
    %1477 = vmatprep.subr.bf16.mxu0 %v928
    %1478 = vmatpush1.bf16.msra.mxu0 %v927
    %1479 = vmatprep.subr.bf16.mxu0 %v924
    %1480 = vmatpush1.bf16.msra.mxu0 %v923
    %1481 = vmatprep.subr.bf16.mxu0 %v920
    %1482 = vmatpush1.bf16.msra.mxu0 %v919
    %1483 = vmatprep.subr.bf16.mxu0 %v916
    %1484 = vmatpush1.bf16.msra.mxu0 %v915
    %1485 = vmatprep.subr.bf16.mxu0 %v912
    %1486 = vmatpush1.bf16.msra.mxu0 %v911
    %1487 = vmatprep.subr.bf16.mxu0 %v908
    %1488 = vmatpush1.bf16.msra.mxu0 %v907
    %1489 = vmatprep.subr.bf16.mxu0 %v968
    %1490 = vmatpush2.bf16.msra.mxu0 %v967
    %1491 = vmatprep.subr.bf16.mxu0 %v964
    %1492 = vmatpush2.bf16.msra.mxu0 %v963
    %1493 = vmatprep.subr.bf16.mxu0 %v960
    %1494 = vmatpush2.bf16.msra.mxu0 %v959
    %1495 = vmatprep.subr.bf16.mxu0 %v956
    %1496 = vmatpush2.bf16.msra.mxu0 %v955
    %1497 = vmatprep.subr.bf16.mxu0 %v952
    %1498 = vmatpush2.bf16.msra.mxu0 %v951
    %1499 = vmatprep.subr.bf16.mxu0 %v948
    %1500 = vmatpush2.bf16.msra.mxu0 %v947
    %1501 = vmatprep.subr.bf16.mxu0 %v944
    %1502 = vmatpush2.bf16.msra.mxu0 %v943
    %1503 = vmatprep.subr.bf16.mxu0 %v940
    %1504 = vmatpush2.bf16.msra.mxu0 %v939
    %1505 = vmatprep.mubr.bf16.mxu0 %v305
    %1506 = vmatmul.mubr.bf16.gmra.mxu0 %v304
    %v1507 = vpop.f32.mrf.mxu0
    %v1508 = vadd.f32 %v273, %v1507
    %v1509 = vpop.f32.mrf.mxu0
    %v1510 = vadd.f32 %v277, %v1509
    %v1511 = vpop.f32.mrf.mxu0
    %v1512 = vadd.f32 %v273, %v1511
    %v1513 = vpop.f32.mrf.mxu0
    %v1514 = vadd.f32 %v277, %v1513
    %1515 = vdwg.mxu0
    %1516 = vmatprep.subr.bf16.mxu0 %v1000
    %1517 = vmatpush1.bf16.msra.mxu0 %v999
    %1518 = vmatprep.subr.bf16.mxu0 %v996
    %1519 = vmatpush1.bf16.msra.mxu0 %v995
    %1520 = vmatprep.subr.bf16.mxu0 %v992
    %1521 = vmatpush1.bf16.msra.mxu0 %v991
    %1522 = vmatprep.subr.bf16.mxu0 %v988
    %1523 = vmatpush1.bf16.msra.mxu0 %v987
    %1524 = vmatprep.subr.bf16.mxu0 %v984
    %1525 = vmatpush1.bf16.msra.mxu0 %v983
    %1526 = vmatprep.subr.bf16.mxu0 %v980
    %1527 = vmatpush1.bf16.msra.mxu0 %v979
    %1528 = vmatprep.subr.bf16.mxu0 %v976
    %1529 = vmatpush1.bf16.msra.mxu0 %v975
    %1530 = vmatprep.subr.bf16.mxu0 %v972
    %1531 = vmatpush1.bf16.msra.mxu0 %v971
    %1532 = vmatprep.subr.bf16.mxu0 %v1032
    %1533 = vmatpush2.bf16.msra.mxu0 %v1031
    %1534 = vmatprep.subr.bf16.mxu0 %v1028
    %1535 = vmatpush2.bf16.msra.mxu0 %v1027
    %1536 = vmatprep.subr.bf16.mxu0 %v1024
    %1537 = vmatpush2.bf16.msra.mxu0 %v1023
    %1538 = vmatprep.subr.bf16.mxu0 %v1020
    %1539 = vmatpush2.bf16.msra.mxu0 %v1019
    %1540 = vmatprep.subr.bf16.mxu0 %v1016
    %1541 = vmatpush2.bf16.msra.mxu0 %v1015
    %1542 = vmatprep.subr.bf16.mxu0 %v1012
    %1543 = vmatpush2.bf16.msra.mxu0 %v1011
    %1544 = vmatprep.subr.bf16.mxu0 %v1008
    %1545 = vmatpush2.bf16.msra.mxu0 %v1007
    %1546 = vmatprep.subr.bf16.mxu0 %v1004
    %1547 = vmatpush2.bf16.msra.mxu0 %v1003
    %1548 = vmatprep.mubr.bf16.mxu0 %v307
    %1549 = vmatmul.mubr.bf16.gmra.mxu0 %v306
    %v1550 = vpop.f32.mrf.mxu0
    %v1551 = vadd.f32 %v1508, %v1550
    %v1552 = vpop.f32.mrf.mxu0
    %v1553 = vadd.f32 %v1510, %v1552
    %v1554 = vpop.f32.mrf.mxu0
    %v1555 = vadd.f32 %v1512, %v1554
    %v1556 = vpop.f32.mrf.mxu0
    %v1557 = vadd.f32 %v1514, %v1556
    %1558 = vdwg.mxu0
    %1559 = vmatprep.subr.bf16.mxu0 %v1064
    %1560 = vmatpush1.bf16.msra.mxu0 %v1063
    %1561 = vmatprep.subr.bf16.mxu0 %v1060
    %1562 = vmatpush1.bf16.msra.mxu0 %v1059
    %1563 = vmatprep.subr.bf16.mxu0 %v1056
    %1564 = vmatpush1.bf16.msra.mxu0 %v1055
    %1565 = vmatprep.subr.bf16.mxu0 %v1052
    %1566 = vmatpush1.bf16.msra.mxu0 %v1051
    %1567 = vmatprep.subr.bf16.mxu0 %v1048
    %1568 = vmatpush1.bf16.msra.mxu0 %v1047
    %1569 = vmatprep.subr.bf16.mxu0 %v1044
    %1570 = vmatpush1.bf16.msra.mxu0 %v1043
    %1571 = vmatprep.subr.bf16.mxu0 %v1040
    %1572 = vmatpush1.bf16.msra.mxu0 %v1039
    %1573 = vmatprep.subr.bf16.mxu0 %v1036
    %1574 = vmatpush1.bf16.msra.mxu0 %v1035
    %1575 = vmatprep.subr.bf16.mxu0 %v1096
    %1576 = vmatpush2.bf16.msra.mxu0 %v1095
    %1577 = vmatprep.subr.bf16.mxu0 %v1092
    %1578 = vmatpush2.bf16.msra.mxu0 %v1091
    %1579 = vmatprep.subr.bf16.mxu0 %v1088
    %1580 = vmatpush2.bf16.msra.mxu0 %v1087
    %1581 = vmatprep.subr.bf16.mxu0 %v1084
    %1582 = vmatpush2.bf16.msra.mxu0 %v1083
    %1583 = vmatprep.subr.bf16.mxu0 %v1080
    %1584 = vmatpush2.bf16.msra.mxu0 %v1079
    %1585 = vmatprep.subr.bf16.mxu0 %v1076
    %1586 = vmatpush2.bf16.msra.mxu0 %v1075
    %1587 = vmatprep.subr.bf16.mxu0 %v1072
    %1588 = vmatpush2.bf16.msra.mxu0 %v1071
    %1589 = vmatprep.subr.bf16.mxu0 %v1068
    %1590 = vmatpush2.bf16.msra.mxu0 %v1067
    %1591 = vmatprep.mubr.bf16.mxu0 %v309
    %1592 = vmatmul.mubr.bf16.gmra.mxu0 %v308
    %v1593 = vpop.f32.mrf.mxu0
    %v1594 = vadd.f32 %v1551, %v1593
    %v1595 = vpop.f32.mrf.mxu0
    %v1596 = vadd.f32 %v1553, %v1595
    %v1597 = vpop.f32.mrf.mxu0
    %v1598 = vadd.f32 %v1555, %v1597
    %v1599 = vpop.f32.mrf.mxu0
    %v1600 = vadd.f32 %v1557, %v1599
    %1601 = vdwg.mxu0
    %1602 = vmatprep.subr.bf16.mxu0 0
    %1603 = vmatpush1.bf16.msra.mxu0 0
    %1604 = vmatprep.subr.bf16.mxu0 0
    %1605 = vmatpush1.bf16.msra.mxu0 0
    %1606 = vmatprep.subr.bf16.mxu0 0
    %1607 = vmatpush1.bf16.msra.mxu0 0
    %1608 = vmatprep.subr.bf16.mxu0 0
    %1609 = vmatpush1.bf16.msra.mxu0 0
    %1610 = vmatprep.subr.bf16.mxu0 0
    %1611 = vmatpush1.bf16.msra.mxu0 0
    %1612 = vmatprep.subr.bf16.mxu0 0
    %1613 = vmatpush1.bf16.msra.mxu0 0
    %1614 = vmatprep.subr.bf16.mxu0 0
    %1615 = vmatpush1.bf16.msra.mxu0 0
    %1616 = vmatprep.subr.bf16.mxu0 %v1100
    %1617 = vmatpush1.bf16.msra.mxu0 %v1099
    %1618 = vmatprep.subr.bf16.mxu0 0
    %1619 = vmatpush2.bf16.msra.mxu0 0
    %1620 = vmatprep.subr.bf16.mxu0 0
    %1621 = vmatpush2.bf16.msra.mxu0 0
    %1622 = vmatprep.subr.bf16.mxu0 0
    %1623 = vmatpush2.bf16.msra.mxu0 0
    %1624 = vmatprep.subr.bf16.mxu0 0
    %1625 = vmatpush2.bf16.msra.mxu0 0
    %1626 = vmatprep.subr.bf16.mxu0 0
    %1627 = vmatpush2.bf16.msra.mxu0 0
    %1628 = vmatprep.subr.bf16.mxu0 0
    %1629 = vmatpush2.bf16.msra.mxu0 0
    %1630 = vmatprep.subr.bf16.mxu0 0
    %1631 = vmatpush2.bf16.msra.mxu0 0
    %1632 = vmatprep.subr.bf16.mxu0 0
    %1633 = vmatpush2.bf16.msra.mxu0 0
    %1634 = vmatprep.mubr.bf16.mxu0 0
    %1635 = vmatmul.mubr.bf16.gmra.mxu0 %v1299
    %v1636 = vpop.f32.mrf.mxu0
    %v1637 = vadd.f32 %v1594, %v1636
    %v1638 = vpop.f32.mrf.mxu0
    %v1639 = vadd.f32 %v1596, %v1638
    %v1640 = vpop.f32.mrf.mxu0
    %v1641 = vadd.f32 %v1598, %v1640
    %v1642 = vpop.f32.mrf.mxu0
    %v1643 = vadd.f32 %v1600, %v1642
    %1644 = vdwg.mxu0
    %v1645 = vmax.f32 %v1465, 0.0
    %v1646 = vmax.f32 %v1467, 0.0
    %v1647 = vmax.f32 %v1637, 0.0
    %v1648 = vmax.f32 %v1639, 0.0
    %v1649 = vmax.f32 %v1469, 0.0
    %v1650 = vmax.f32 %v1471, 0.0
    %v1651 = vmax.f32 %v1641, 0.0
    %v1652 = vmax.f32 %v1643, 0.0
    %v1653 = vpack.c.bf16 %v1649, %v1645
    %v1654 = vpack.c.bf16 %v1650, %v1646
    %v1655 = vpack.c.bf16 %v1651, %v1647
    %v1656 = vpack.c.bf16 %v1652, %v1648
    %v1657 = vld [vmem:[#allocation5] sm:$0xff]
    %v1658 = vld [vmem:[#allocation5 + $0x8] sm:$0xff]
    %v1659 = vld [vmem:[#allocation5 + $0x10] sm:$0xff]
    %v1660 = vld [vmem:[#allocation5 + $0x18] sm:$0xff]
    %v1661 = vld [vmem:[#allocation5 + $0x20] sm:$0xff]
    %v1662 = vld [vmem:[#allocation5 + $0x28] sm:$0xff]
    %v1663 = vld [vmem:[#allocation5 + $0x30] sm:$0xff]
    %v1664 = vld [vmem:[#allocation5 + $0x38] sm:$0xff]
    %v1665 = vld [vmem:[#allocation5 + $0x40] sm:$0xff]
    %v1666 = vld [vmem:[#allocation5 + $0x48] sm:$0xff]
    %v1667 = vld [vmem:[#allocation5 + $0x50] sm:$0xff]
    %v1668 = vld [vmem:[#allocation5 + $0x58] sm:$0xff]
    %v1669 = vld [vmem:[#allocation5 + $0x60] sm:$0xff]
    %v1670 = vld [vmem:[#allocation5 + $0x68] sm:$0xff]
    %v1671 = vld [vmem:[#allocation5 + $0x70] sm:$0xff]
    %v1672 = vld [vmem:[#allocation5 + $0x78] sm:$0xff]
    %v1673 = vld [vmem:[#allocation5 + $0x80] sm:$0xff]
    %v1674 = vld [vmem:[#allocation5 + $0x88] sm:$0xff]
    %v1675 = vld [vmem:[#allocation5 + $0x90] sm:$0xff]
    %v1676 = vld [vmem:[#allocation5 + $0x98] sm:$0xff]
    %v1677 = vld [vmem:[#allocation5 + $0xa0] sm:$0xff]
    %v1678 = vld [vmem:[#allocation5 + $0xa8] sm:$0xff]
    %v1679 = vld [vmem:[#allocation5 + $0xb0] sm:$0xff]
    %v1680 = vld [vmem:[#allocation5 + $0xb8] sm:$0xff]
    %v1681 = vld [vmem:[#allocation5 + $0xc0] sm:$0xff]
    %v1682 = vld [vmem:[#allocation5 + $0xc8] sm:$0xff]
    %v1683 = vld [vmem:[#allocation5 + $0xd0] sm:$0xff]
    %v1684 = vld [vmem:[#allocation5 + $0xd8] sm:$0xff]
    %v1685 = vld [vmem:[#allocation5 + $0xe0] sm:$0xff]
    %v1686 = vld [vmem:[#allocation5 + $0xe8] sm:$0xff]
    %v1687 = vld [vmem:[#allocation5 + $0xf0] sm:$0xff]
    %v1688 = vld [vmem:[#allocation5 + $0xf8] sm:$0xff]
    %v1689 = vld [vmem:[#allocation5 + $0x100] sm:$0xff]
    %v1690 = vld [vmem:[#allocation5 + $0x108] sm:$0xff]
    %v1691 = vld [vmem:[#allocation5 + $0x110] sm:$0xff]
    %v1692 = vld [vmem:[#allocation5 + $0x118] sm:$0xff]
    %v1693 = vld [vmem:[#allocation5 + $0x120] sm:$0xff]
    %v1694 = vld [vmem:[#allocation5 + $0x128] sm:$0xff]
    %v1695 = vld [vmem:[#allocation5 + $0x130] sm:$0xff]
    %v1696 = vld [vmem:[#allocation5 + $0x138] sm:$0xff]
    %v1697 = vld [vmem:[#allocation5 + $0x140] sm:$0xff]
    %v1698 = vld [vmem:[#allocation5 + $0x148] sm:$0xff]
    %v1699 = vld [vmem:[#allocation5 + $0x150] sm:$0xff]
    %v1700 = vld [vmem:[#allocation5 + $0x158] sm:$0xff]
    %v1701 = vld [vmem:[#allocation5 + $0x160] sm:$0xff]
    %v1702 = vld [vmem:[#allocation5 + $0x168] sm:$0xff]
    %v1703 = vld [vmem:[#allocation5 + $0x170] sm:$0xff]
    %v1704 = vld [vmem:[#allocation5 + $0x178] sm:$0xff]
    %v1705 = vld [vmem:[#allocation5 + $0x180] sm:$0xff]
    %v1706 = vld [vmem:[#allocation5 + $0x188] sm:$0xff]
    %v1707 = vld [vmem:[#allocation5 + $0x190] sm:$0xff]
    %v1708 = vld [vmem:[#allocation5 + $0x198] sm:$0xff]
    %v1709 = vld [vmem:[#allocation5 + $0x1a0] sm:$0xff]
    %v1710 = vld [vmem:[#allocation5 + $0x1a8] sm:$0xff]
    %v1711 = vld [vmem:[#allocation5 + $0x1b0] sm:$0xff]
    %v1712 = vld [vmem:[#allocation5 + $0x1b8] sm:$0xff]
    %v1713 = vld [vmem:[#allocation5 + $0x1c0] sm:$0xff]
    %v1714 = vld [vmem:[#allocation5 + $0x1c8] sm:$0xff]
    %v1715 = vld [vmem:[#allocation5 + $0x1d0] sm:$0xff]
    %v1716 = vld [vmem:[#allocation5 + $0x1d8] sm:$0xff]
    %v1717 = vld [vmem:[#allocation5 + $0x1e0] sm:$0xff]
    %v1718 = vld [vmem:[#allocation5 + $0x1e8] sm:$0xff]
    %v1719 = vld [vmem:[#allocation5 + $0x1f0] sm:$0xff]
    %v1720 = vld [vmem:[#allocation5 + $0x1f8] sm:$0xff]
    %v1721 = vld [vmem:[#allocation5 + $0x200] sm:$0xff]
    %v1722 = vld [vmem:[#allocation5 + $0x208] sm:$0xff]
    %v1723 = vld [vmem:[#allocation5 + $0x210] sm:$0xff]
    %v1724 = vld [vmem:[#allocation5 + $0x218] sm:$0xff]
    %v1725 = vld [vmem:[#allocation5 + $0x220] sm:$0xff]
    %v1726 = vld [vmem:[#allocation5 + $0x228] sm:$0xff]
    %v1727 = vld [vmem:[#allocation5 + $0x230] sm:$0xff]
    %v1728 = vld [vmem:[#allocation5 + $0x238] sm:$0xff]
    %v1729 = vld [vmem:[#allocation5 + $0x240] sm:$0xff]
    %v1730 = vld [vmem:[#allocation5 + $0x248] sm:$0xff]
    %v1731 = vld [vmem:[#allocation5 + $0x250] sm:$0xff]
    %v1732 = vld [vmem:[#allocation5 + $0x258] sm:$0xff]
    %v1733 = vld [vmem:[#allocation5 + $0x260] sm:$0xff]
    %v1734 = vld [vmem:[#allocation5 + $0x268] sm:$0xff]
    %v1735 = vld [vmem:[#allocation5 + $0x270] sm:$0xff]
    %v1736 = vld [vmem:[#allocation5 + $0x278] sm:$0xff]
    %v1737 = vld [vmem:[#allocation5 + $0x280] sm:$0xff]
    %v1738 = vld [vmem:[#allocation5 + $0x288] sm:$0xff]
    %v1739 = vld [vmem:[#allocation5 + $0x290] sm:$0xff]
    %v1740 = vld [vmem:[#allocation5 + $0x298] sm:$0xff]
    %v1741 = vld [vmem:[#allocation5 + $0x2a0] sm:$0xff]
    %v1742 = vld [vmem:[#allocation5 + $0x2a8] sm:$0xff]
    %v1743 = vld [vmem:[#allocation5 + $0x2b0] sm:$0xff]
    %v1744 = vld [vmem:[#allocation5 + $0x2b8] sm:$0xff]
    %v1745 = vld [vmem:[#allocation5 + $0x2c0] sm:$0xff]
    %v1746 = vld [vmem:[#allocation5 + $0x2c8] sm:$0xff]
    %v1747 = vld [vmem:[#allocation5 + $0x2d0] sm:$0xff]
    %v1748 = vld [vmem:[#allocation5 + $0x2d8] sm:$0xff]
    %v1749 = vld [vmem:[#allocation5 + $0x2e0] sm:$0xff]
    %v1750 = vld [vmem:[#allocation5 + $0x2e8] sm:$0xff]
    %v1751 = vld [vmem:[#allocation5 + $0x2f0] sm:$0xff]
    %v1752 = vld [vmem:[#allocation5 + $0x2f8] sm:$0xff]
    %v1753 = vld [vmem:[#allocation5 + $0x300] sm:$0xff]
    %v1754 = vld [vmem:[#allocation5 + $0x308] sm:$0xff]
    %v1755 = vld [vmem:[#allocation5 + $0x310] sm:$0xff]
    %v1756 = vld [vmem:[#allocation5 + $0x318] sm:$0xff]
    %v1757 = vld [vmem:[#allocation5 + $0x320] sm:$0xff]
    %v1758 = vld [vmem:[#allocation5 + $0x328] sm:$0xff]
    %v1759 = vld [vmem:[#allocation5 + $0x330] sm:$0xff]
    %v1760 = vld [vmem:[#allocation5 + $0x338] sm:$0xff]
    %v1761 = vld [vmem:[#allocation5 + $0x340] sm:$0xff]
    %v1762 = vld [vmem:[#allocation5 + $0x348] sm:$0xff]
    %v1763 = vld [vmem:[#allocation5 + $0x350] sm:$0xff]
    %v1764 = vld [vmem:[#allocation5 + $0x358] sm:$0xff]
    %v1765 = vld [vmem:[#allocation5 + $0x360] sm:$0xff]
    %v1766 = vld [vmem:[#allocation5 + $0x368] sm:$0xff]
    %v1767 = vld [vmem:[#allocation5 + $0x370] sm:$0xff]
    %v1768 = vld [vmem:[#allocation5 + $0x378] sm:$0xff]
    %v1769 = vld [vmem:[#allocation5 + $0x380] sm:$0xff]
    %v1770 = vld [vmem:[#allocation5 + $0x388] sm:$0xff]
    %v1771 = vld [vmem:[#allocation5 + $0x390] sm:$0xff]
    %v1772 = vld [vmem:[#allocation5 + $0x398] sm:$0xff]
    %v1773 = vld [vmem:[#allocation5 + $0x3a0] sm:$0xff]
    %v1774 = vld [vmem:[#allocation5 + $0x3a8] sm:$0xff]
    %v1775 = vld [vmem:[#allocation5 + $0x3b0] sm:$0xff]
    %v1776 = vld [vmem:[#allocation5 + $0x3b8] sm:$0xff]
    %v1777 = vld [vmem:[#allocation5 + $0x3c0] sm:$0xff]
    %v1778 = vld [vmem:[#allocation5 + $0x3c8] sm:$0xff]
    %v1779 = vld [vmem:[#allocation5 + $0x3d0] sm:$0xff]
    %v1780 = vld [vmem:[#allocation5 + $0x3d8] sm:$0xff]
    %v1781 = vld [vmem:[#allocation5 + $0x3e0] sm:$0xff]
    %v1782 = vld [vmem:[#allocation5 + $0x3e8] sm:$0xff]
    %v1783 = vld [vmem:[#allocation5 + $0x3f0] sm:$0xff]
    %v1784 = vld [vmem:[#allocation5 + $0x3f8] sm:$0xff]
    %v1785 = vld [vmem:[%s4] sm:$0xf]
    %v1787 = vlaneseq
    %v1788 = vshrl.u32 %v1787, 7
    %v1789 = vsub.s32 0, %v1788
    %v1790 = vrot.slane %v1785, %v1789
    %v1791 = vlaneseq
    %v1792 = vshrl.u32 %v1791, 7
    %v1793 = vsub.s32 1, %v1792
    %v1794 = vrot.slane %v1785, %v1793
    %v1795 = vlaneseq
    %v1796 = vshrl.u32 %v1795, 7
    %v1797 = vsub.s32 2, %v1796
    %v1798 = vrot.slane %v1785, %v1797
    %v1799 = vlaneseq
    %v1800 = vshrl.u32 %v1799, 7
    %v1801 = vsub.s32 3, %v1800
    %v1802 = vrot.slane %v1785, %v1801
    %v1935 = vunpack.c.l.b16 %v1657
    %v1936 = vunpack.c.h.b16 %v1657
    %v1937 = vunpack.c.l.b16 %v1658
    %v1938 = vunpack.c.h.b16 %v1658
    %v1939 = vunpack.c.l.b16 %v1659
    %v1940 = vunpack.c.h.b16 %v1659
    %v1941 = vunpack.c.l.b16 %v1660
    %v1942 = vunpack.c.h.b16 %v1660
    %v1943 = vunpack.c.l.b16 %v1661
    %v1944 = vunpack.c.h.b16 %v1661
    %v1945 = vunpack.c.l.b16 %v1662
    %v1946 = vunpack.c.h.b16 %v1662
    %v1947 = vunpack.c.l.b16 %v1663
    %v1948 = vunpack.c.h.b16 %v1663
    %v1949 = vunpack.c.l.b16 %v1664
    %v1950 = vunpack.c.h.b16 %v1664
    %v1951 = vunpack.c.l.b16 %v1665
    %v1952 = vunpack.c.h.b16 %v1665
    %v1953 = vunpack.c.l.b16 %v1666
    %v1954 = vunpack.c.h.b16 %v1666
    %v1955 = vunpack.c.l.b16 %v1667
    %v1956 = vunpack.c.h.b16 %v1667
    %v1957 = vunpack.c.l.b16 %v1668
    %v1958 = vunpack.c.h.b16 %v1668
    %v1959 = vunpack.c.l.b16 %v1669
    %v1960 = vunpack.c.h.b16 %v1669
    %v1961 = vunpack.c.l.b16 %v1670
    %v1962 = vunpack.c.h.b16 %v1670
    %v1963 = vunpack.c.l.b16 %v1671
    %v1964 = vunpack.c.h.b16 %v1671
    %v1965 = vunpack.c.l.b16 %v1672
    %v1966 = vunpack.c.h.b16 %v1672
    %v1967 = vunpack.c.l.b16 %v1673
    %v1968 = vunpack.c.h.b16 %v1673
    %v1969 = vunpack.c.l.b16 %v1674
    %v1970 = vunpack.c.h.b16 %v1674
    %v1971 = vunpack.c.l.b16 %v1675
    %v1972 = vunpack.c.h.b16 %v1675
    %v1973 = vunpack.c.l.b16 %v1676
    %v1974 = vunpack.c.h.b16 %v1676
    %v1975 = vunpack.c.l.b16 %v1677
    %v1976 = vunpack.c.h.b16 %v1677
    %v1977 = vunpack.c.l.b16 %v1678
    %v1978 = vunpack.c.h.b16 %v1678
    %v1979 = vunpack.c.l.b16 %v1679
    %v1980 = vunpack.c.h.b16 %v1679
    %v1981 = vunpack.c.l.b16 %v1680
    %v1982 = vunpack.c.h.b16 %v1680
    %v1983 = vunpack.c.l.b16 %v1681
    %v1984 = vunpack.c.h.b16 %v1681
    %v1985 = vunpack.c.l.b16 %v1682
    %v1986 = vunpack.c.h.b16 %v1682
    %v1987 = vunpack.c.l.b16 %v1683
    %v1988 = vunpack.c.h.b16 %v1683
    %v1989 = vunpack.c.l.b16 %v1684
    %v1990 = vunpack.c.h.b16 %v1684
    %v1991 = vunpack.c.l.b16 %v1685
    %v1992 = vunpack.c.h.b16 %v1685
    %v1993 = vunpack.c.l.b16 %v1686
    %v1994 = vunpack.c.h.b16 %v1686
    %v1995 = vunpack.c.l.b16 %v1687
    %v1996 = vunpack.c.h.b16 %v1687
    %v1997 = vunpack.c.l.b16 %v1688
    %v1998 = vunpack.c.h.b16 %v1688
    %v1999 = vunpack.c.l.b16 %v1689
    %v2000 = vunpack.c.h.b16 %v1689
    %v2001 = vunpack.c.l.b16 %v1690
    %v2002 = vunpack.c.h.b16 %v1690
    %v2003 = vunpack.c.l.b16 %v1691
    %v2004 = vunpack.c.h.b16 %v1691
    %v2005 = vunpack.c.l.b16 %v1692
    %v2006 = vunpack.c.h.b16 %v1692
    %v2007 = vunpack.c.l.b16 %v1693
    %v2008 = vunpack.c.h.b16 %v1693
    %v2009 = vunpack.c.l.b16 %v1694
    %v2010 = vunpack.c.h.b16 %v1694
    %v2011 = vunpack.c.l.b16 %v1695
    %v2012 = vunpack.c.h.b16 %v1695
    %v2013 = vunpack.c.l.b16 %v1696
    %v2014 = vunpack.c.h.b16 %v1696
    %v2015 = vunpack.c.l.b16 %v1697
    %v2016 = vunpack.c.h.b16 %v1697
    %v2017 = vunpack.c.l.b16 %v1698
    %v2018 = vunpack.c.h.b16 %v1698
    %v2019 = vunpack.c.l.b16 %v1699
    %v2020 = vunpack.c.h.b16 %v1699
    %v2021 = vunpack.c.l.b16 %v1700
    %v2022 = vunpack.c.h.b16 %v1700
    %v2023 = vunpack.c.l.b16 %v1701
    %v2024 = vunpack.c.h.b16 %v1701
    %v2025 = vunpack.c.l.b16 %v1702
    %v2026 = vunpack.c.h.b16 %v1702
    %v2027 = vunpack.c.l.b16 %v1703
    %v2028 = vunpack.c.h.b16 %v1703
    %v2029 = vunpack.c.l.b16 %v1704
    %v2030 = vunpack.c.h.b16 %v1704
    %v2031 = vunpack.c.l.b16 %v1705
    %v2032 = vunpack.c.h.b16 %v1705
    %v2033 = vunpack.c.l.b16 %v1706
    %v2034 = vunpack.c.h.b16 %v1706
    %v2035 = vunpack.c.l.b16 %v1707
    %v2036 = vunpack.c.h.b16 %v1707
    %v2037 = vunpack.c.l.b16 %v1708
    %v2038 = vunpack.c.h.b16 %v1708
    %v2039 = vunpack.c.l.b16 %v1709
    %v2040 = vunpack.c.h.b16 %v1709
    %v2041 = vunpack.c.l.b16 %v1710
    %v2042 = vunpack.c.h.b16 %v1710
    %v2043 = vunpack.c.l.b16 %v1711
    %v2044 = vunpack.c.h.b16 %v1711
    %v2045 = vunpack.c.l.b16 %v1712
    %v2046 = vunpack.c.h.b16 %v1712
    %v2047 = vunpack.c.l.b16 %v1713
    %v2048 = vunpack.c.h.b16 %v1713
    %v2049 = vunpack.c.l.b16 %v1714
    %v2050 = vunpack.c.h.b16 %v1714
    %v2051 = vunpack.c.l.b16 %v1715
    %v2052 = vunpack.c.h.b16 %v1715
    %v2053 = vunpack.c.l.b16 %v1716
    %v2054 = vunpack.c.h.b16 %v1716
    %v2055 = vunpack.c.l.b16 %v1717
    %v2056 = vunpack.c.h.b16 %v1717
    %v2057 = vunpack.c.l.b16 %v1718
    %v2058 = vunpack.c.h.b16 %v1718
    %v2059 = vunpack.c.l.b16 %v1719
    %v2060 = vunpack.c.h.b16 %v1719
    %v2061 = vunpack.c.l.b16 %v1720
    %v2062 = vunpack.c.h.b16 %v1720
    %v2063 = vunpack.c.l.b16 %v1721
    %v2064 = vunpack.c.h.b16 %v1721
    %v2065 = vunpack.c.l.b16 %v1722
    %v2066 = vunpack.c.h.b16 %v1722
    %v2067 = vunpack.c.l.b16 %v1723
    %v2068 = vunpack.c.h.b16 %v1723
    %v2069 = vunpack.c.l.b16 %v1724
    %v2070 = vunpack.c.h.b16 %v1724
    %v2071 = vunpack.c.l.b16 %v1725
    %v2072 = vunpack.c.h.b16 %v1725
    %v2073 = vunpack.c.l.b16 %v1726
    %v2074 = vunpack.c.h.b16 %v1726
    %v2075 = vunpack.c.l.b16 %v1727
    %v2076 = vunpack.c.h.b16 %v1727
    %v2077 = vunpack.c.l.b16 %v1728
    %v2078 = vunpack.c.h.b16 %v1728
    %v2079 = vunpack.c.l.b16 %v1729
    %v2080 = vunpack.c.h.b16 %v1729
    %v2081 = vunpack.c.l.b16 %v1730
    %v2082 = vunpack.c.h.b16 %v1730
    %v2083 = vunpack.c.l.b16 %v1731
    %v2084 = vunpack.c.h.b16 %v1731
    %v2085 = vunpack.c.l.b16 %v1732
    %v2086 = vunpack.c.h.b16 %v1732
    %v2087 = vunpack.c.l.b16 %v1733
    %v2088 = vunpack.c.h.b16 %v1733
    %v2089 = vunpack.c.l.b16 %v1734
    %v2090 = vunpack.c.h.b16 %v1734
    %v2091 = vunpack.c.l.b16 %v1735
    %v2092 = vunpack.c.h.b16 %v1735
    %v2093 = vunpack.c.l.b16 %v1736
    %v2094 = vunpack.c.h.b16 %v1736
    %v2095 = vunpack.c.l.b16 %v1737
    %v2096 = vunpack.c.h.b16 %v1737
    %v2097 = vunpack.c.l.b16 %v1738
    %v2098 = vunpack.c.h.b16 %v1738
    %v2099 = vunpack.c.l.b16 %v1739
    %v2100 = vunpack.c.h.b16 %v1739
    %v2101 = vunpack.c.l.b16 %v1740
    %v2102 = vunpack.c.h.b16 %v1740
    %v2103 = vunpack.c.l.b16 %v1741
    %v2104 = vunpack.c.h.b16 %v1741
    %v2105 = vunpack.c.l.b16 %v1742
    %v2106 = vunpack.c.h.b16 %v1742
    %v2107 = vunpack.c.l.b16 %v1743
    %v2108 = vunpack.c.h.b16 %v1743
    %v2109 = vunpack.c.l.b16 %v1744
    %v2110 = vunpack.c.h.b16 %v1744
    %v2111 = vunpack.c.l.b16 %v1745
    %v2112 = vunpack.c.h.b16 %v1745
    %v2113 = vunpack.c.l.b16 %v1746
    %v2114 = vunpack.c.h.b16 %v1746
    %v2115 = vunpack.c.l.b16 %v1747
    %v2116 = vunpack.c.h.b16 %v1747
    %v2117 = vunpack.c.l.b16 %v1748
    %v2118 = vunpack.c.h.b16 %v1748
    %v2119 = vunpack.c.l.b16 %v1749
    %v2120 = vunpack.c.h.b16 %v1749
    %v2121 = vunpack.c.l.b16 %v1750
    %v2122 = vunpack.c.h.b16 %v1750
    %v2123 = vunpack.c.l.b16 %v1751
    %v2124 = vunpack.c.h.b16 %v1751
    %v2125 = vunpack.c.l.b16 %v1752
    %v2126 = vunpack.c.h.b16 %v1752
    %v2127 = vunpack.c.l.b16 %v1753
    %v2128 = vunpack.c.h.b16 %v1753
    %v2129 = vunpack.c.l.b16 %v1754
    %v2130 = vunpack.c.h.b16 %v1754
    %v2131 = vunpack.c.l.b16 %v1755
    %v2132 = vunpack.c.h.b16 %v1755
    %v2133 = vunpack.c.l.b16 %v1756
    %v2134 = vunpack.c.h.b16 %v1756
    %v2135 = vunpack.c.l.b16 %v1757
    %v2136 = vunpack.c.h.b16 %v1757
    %v2137 = vunpack.c.l.b16 %v1758
    %v2138 = vunpack.c.h.b16 %v1758
    %v2139 = vunpack.c.l.b16 %v1759
    %v2140 = vunpack.c.h.b16 %v1759
    %v2141 = vunpack.c.l.b16 %v1760
    %v2142 = vunpack.c.h.b16 %v1760
    %v2143 = vunpack.c.l.b16 %v1761
    %v2144 = vunpack.c.h.b16 %v1761
    %v2145 = vunpack.c.l.b16 %v1762
    %v2146 = vunpack.c.h.b16 %v1762
    %v2147 = vunpack.c.l.b16 %v1763
    %v2148 = vunpack.c.h.b16 %v1763
    %v2149 = vunpack.c.l.b16 %v1764
    %v2150 = vunpack.c.h.b16 %v1764
    %v2151 = vunpack.c.l.b16 %v1765
    %v2152 = vunpack.c.h.b16 %v1765
    %v2153 = vunpack.c.l.b16 %v1766
    %v2154 = vunpack.c.h.b16 %v1766
    %v2155 = vunpack.c.l.b16 %v1767
    %v2156 = vunpack.c.h.b16 %v1767
    %v2157 = vunpack.c.l.b16 %v1768
    %v2158 = vunpack.c.h.b16 %v1768
    %v2159 = vunpack.c.l.b16 %v1769
    %v2160 = vunpack.c.h.b16 %v1769
    %v2161 = vunpack.c.l.b16 %v1770
    %v2162 = vunpack.c.h.b16 %v1770
    %v2163 = vunpack.c.l.b16 %v1771
    %v2164 = vunpack.c.h.b16 %v1771
    %v2165 = vunpack.c.l.b16 %v1772
    %v2166 = vunpack.c.h.b16 %v1772
    %v2167 = vunpack.c.l.b16 %v1773
    %v2168 = vunpack.c.h.b16 %v1773
    %v2169 = vunpack.c.l.b16 %v1774
    %v2170 = vunpack.c.h.b16 %v1774
    %v2171 = vunpack.c.l.b16 %v1775
    %v2172 = vunpack.c.h.b16 %v1775
    %v2173 = vunpack.c.l.b16 %v1776
    %v2174 = vunpack.c.h.b16 %v1776
    %v2175 = vunpack.c.l.b16 %v1777
    %v2176 = vunpack.c.h.b16 %v1777
    %v2177 = vunpack.c.l.b16 %v1778
    %v2178 = vunpack.c.h.b16 %v1778
    %v2179 = vunpack.c.l.b16 %v1779
    %v2180 = vunpack.c.h.b16 %v1779
    %v2181 = vunpack.c.l.b16 %v1780
    %v2182 = vunpack.c.h.b16 %v1780
    %v2183 = vunpack.c.l.b16 %v1781
    %v2184 = vunpack.c.h.b16 %v1781
    %v2185 = vunpack.c.l.b16 %v1782
    %v2186 = vunpack.c.h.b16 %v1782
    %v2187 = vunpack.c.l.b16 %v1783
    %v2188 = vunpack.c.h.b16 %v1783
    %v2189 = vunpack.c.l.b16 %v1784
    %v2190 = vunpack.c.h.b16 %v1784
    %v2191 = vpack.c.b16 %v1939, %v1935
    %v2192 = vpack.c.b16 %v1940, %v1936
    %v2193 = vpack.c.b16 %v1941, %v1937
    %v2194 = vpack.c.b16 %v1942, %v1938
    %v2195 = vpack.c.b16 %v1947, %v1943
    %v2196 = vpack.c.b16 %v1948, %v1944
    %v2197 = vpack.c.b16 %v1949, %v1945
    %v2198 = vpack.c.b16 %v1950, %v1946
    %v2199 = vpack.c.b16 %v1955, %v1951
    %v2200 = vpack.c.b16 %v1956, %v1952
    %v2201 = vpack.c.b16 %v1957, %v1953
    %v2202 = vpack.c.b16 %v1958, %v1954
    %v2203 = vpack.c.b16 %v1963, %v1959
    %v2204 = vpack.c.b16 %v1964, %v1960
    %v2205 = vpack.c.b16 %v1965, %v1961
    %v2206 = vpack.c.b16 %v1966, %v1962
    %v2207 = vpack.c.b16 %v1971, %v1967
    %v2208 = vpack.c.b16 %v1972, %v1968
    %v2209 = vpack.c.b16 %v1973, %v1969
    %v2210 = vpack.c.b16 %v1974, %v1970
    %v2211 = vpack.c.b16 %v1979, %v1975
    %v2212 = vpack.c.b16 %v1980, %v1976
    %v2213 = vpack.c.b16 %v1981, %v1977
    %v2214 = vpack.c.b16 %v1982, %v1978
    %v2215 = vpack.c.b16 %v1987, %v1983
    %v2216 = vpack.c.b16 %v1988, %v1984
    %v2217 = vpack.c.b16 %v1989, %v1985
    %v2218 = vpack.c.b16 %v1990, %v1986
    %v2219 = vpack.c.b16 %v1995, %v1991
    %v2220 = vpack.c.b16 %v1996, %v1992
    %v2221 = vpack.c.b16 %v1997, %v1993
    %v2222 = vpack.c.b16 %v1998, %v1994
    %v2223 = vpack.c.b16 %v2003, %v1999
    %v2224 = vpack.c.b16 %v2004, %v2000
    %v2225 = vpack.c.b16 %v2005, %v2001
    %v2226 = vpack.c.b16 %v2006, %v2002
    %v2227 = vpack.c.b16 %v2011, %v2007
    %v2228 = vpack.c.b16 %v2012, %v2008
    %v2229 = vpack.c.b16 %v2013, %v2009
    %v2230 = vpack.c.b16 %v2014, %v2010
    %v2231 = vpack.c.b16 %v2019, %v2015
    %v2232 = vpack.c.b16 %v2020, %v2016
    %v2233 = vpack.c.b16 %v2021, %v2017
    %v2234 = vpack.c.b16 %v2022, %v2018
    %v2235 = vpack.c.b16 %v2027, %v2023
    %v2236 = vpack.c.b16 %v2028, %v2024
    %v2237 = vpack.c.b16 %v2029, %v2025
    %v2238 = vpack.c.b16 %v2030, %v2026
    %v2239 = vpack.c.b16 %v2035, %v2031
    %v2240 = vpack.c.b16 %v2036, %v2032
    %v2241 = vpack.c.b16 %v2037, %v2033
    %v2242 = vpack.c.b16 %v2038, %v2034
    %v2243 = vpack.c.b16 %v2043, %v2039
    %v2244 = vpack.c.b16 %v2044, %v2040
    %v2245 = vpack.c.b16 %v2045, %v2041
    %v2246 = vpack.c.b16 %v2046, %v2042
    %v2247 = vpack.c.b16 %v2051, %v2047
    %v2248 = vpack.c.b16 %v2052, %v2048
    %v2249 = vpack.c.b16 %v2053, %v2049
    %v2250 = vpack.c.b16 %v2054, %v2050
    %v2251 = vpack.c.b16 %v2059, %v2055
    %v2252 = vpack.c.b16 %v2060, %v2056
    %v2253 = vpack.c.b16 %v2061, %v2057
    %v2254 = vpack.c.b16 %v2062, %v2058
    %v2255 = vpack.c.b16 %v2067, %v2063
    %v2256 = vpack.c.b16 %v2068, %v2064
    %v2257 = vpack.c.b16 %v2069, %v2065
    %v2258 = vpack.c.b16 %v2070, %v2066
    %v2259 = vpack.c.b16 %v2075, %v2071
    %v2260 = vpack.c.b16 %v2076, %v2072
    %v2261 = vpack.c.b16 %v2077, %v2073
    %v2262 = vpack.c.b16 %v2078, %v2074
    %v2263 = vpack.c.b16 %v2083, %v2079
    %v2264 = vpack.c.b16 %v2084, %v2080
    %v2265 = vpack.c.b16 %v2085, %v2081
    %v2266 = vpack.c.b16 %v2086, %v2082
    %v2267 = vpack.c.b16 %v2091, %v2087
    %v2268 = vpack.c.b16 %v2092, %v2088
    %v2269 = vpack.c.b16 %v2093, %v2089
    %v2270 = vpack.c.b16 %v2094, %v2090
    %v2271 = vpack.c.b16 %v2099, %v2095
    %v2272 = vpack.c.b16 %v2100, %v2096
    %v2273 = vpack.c.b16 %v2101, %v2097
    %v2274 = vpack.c.b16 %v2102, %v2098
    %v2275 = vpack.c.b16 %v2107, %v2103
    %v2276 = vpack.c.b16 %v2108, %v2104
    %v2277 = vpack.c.b16 %v2109, %v2105
    %v2278 = vpack.c.b16 %v2110, %v2106
    %v2279 = vpack.c.b16 %v2115, %v2111
    %v2280 = vpack.c.b16 %v2116, %v2112
    %v2281 = vpack.c.b16 %v2117, %v2113
    %v2282 = vpack.c.b16 %v2118, %v2114
    %v2283 = vpack.c.b16 %v2123, %v2119
    %v2284 = vpack.c.b16 %v2124, %v2120
    %v2285 = vpack.c.b16 %v2125, %v2121
    %v2286 = vpack.c.b16 %v2126, %v2122
    %v2287 = vpack.c.b16 %v2131, %v2127
    %v2288 = vpack.c.b16 %v2132, %v2128
    %v2289 = vpack.c.b16 %v2133, %v2129
    %v2290 = vpack.c.b16 %v2134, %v2130
    %v2291 = vpack.c.b16 %v2139, %v2135
    %v2292 = vpack.c.b16 %v2140, %v2136
    %v2293 = vpack.c.b16 %v2141, %v2137
    %v2294 = vpack.c.b16 %v2142, %v2138
    %v2295 = vpack.c.b16 %v2147, %v2143
    %v2296 = vpack.c.b16 %v2148, %v2144
    %v2297 = vpack.c.b16 %v2149, %v2145
    %v2298 = vpack.c.b16 %v2150, %v2146
    %v2299 = vpack.c.b16 %v2155, %v2151
    %v2300 = vpack.c.b16 %v2156, %v2152
    %v2301 = vpack.c.b16 %v2157, %v2153
    %v2302 = vpack.c.b16 %v2158, %v2154
    %v2303 = vpack.c.b16 %v2163, %v2159
    %v2304 = vpack.c.b16 %v2164, %v2160
    %v2305 = vpack.c.b16 %v2165, %v2161
    %v2306 = vpack.c.b16 %v2166, %v2162
    %v2307 = vpack.c.b16 %v2171, %v2167
    %v2308 = vpack.c.b16 %v2172, %v2168
    %v2309 = vpack.c.b16 %v2173, %v2169
    %v2310 = vpack.c.b16 %v2174, %v2170
    %v2311 = vpack.c.b16 %v2179, %v2175
    %v2312 = vpack.c.b16 %v2180, %v2176
    %v2313 = vpack.c.b16 %v2181, %v2177
    %v2314 = vpack.c.b16 %v2182, %v2178
    %v2315 = vpack.c.b16 %v2187, %v2183
    %v2316 = vpack.c.b16 %v2188, %v2184
    %v2317 = vpack.c.b16 %v2189, %v2185
    %v2318 = vpack.c.b16 %v2190, %v2186
    %2447 = vmatprep.subr.bf16.mxu0 %v2220
    %2448 = vmatpush1.bf16.msra.mxu0 %v2219
    %2449 = vmatprep.subr.bf16.mxu0 %v2216
    %2450 = vmatpush1.bf16.msra.mxu0 %v2215
    %2451 = vmatprep.subr.bf16.mxu0 %v2212
    %2452 = vmatpush1.bf16.msra.mxu0 %v2211
    %2453 = vmatprep.subr.bf16.mxu0 %v2208
    %2454 = vmatpush1.bf16.msra.mxu0 %v2207
    %2455 = vmatprep.subr.bf16.mxu0 %v2204
    %2456 = vmatpush1.bf16.msra.mxu0 %v2203
    %2457 = vmatprep.subr.bf16.mxu0 %v2200
    %2458 = vmatpush1.bf16.msra.mxu0 %v2199
    %2459 = vmatprep.subr.bf16.mxu0 %v2196
    %2460 = vmatpush1.bf16.msra.mxu0 %v2195
    %2461 = vmatprep.subr.bf16.mxu0 %v2192
    %2462 = vmatpush1.bf16.msra.mxu0 %v2191
    %2463 = vmatprep.subr.bf16.mxu0 %v2252
    %2464 = vmatpush2.bf16.msra.mxu0 %v2251
    %2465 = vmatprep.subr.bf16.mxu0 %v2248
    %2466 = vmatpush2.bf16.msra.mxu0 %v2247
    %2467 = vmatprep.subr.bf16.mxu0 %v2244
    %2468 = vmatpush2.bf16.msra.mxu0 %v2243
    %2469 = vmatprep.subr.bf16.mxu0 %v2240
    %2470 = vmatpush2.bf16.msra.mxu0 %v2239
    %2471 = vmatprep.subr.bf16.mxu0 %v2236
    %2472 = vmatpush2.bf16.msra.mxu0 %v2235
    %2473 = vmatprep.subr.bf16.mxu0 %v2232
    %2474 = vmatpush2.bf16.msra.mxu0 %v2231
    %2475 = vmatprep.subr.bf16.mxu0 %v2228
    %2476 = vmatpush2.bf16.msra.mxu0 %v2227
    %2477 = vmatprep.subr.bf16.mxu0 %v2224
    %2478 = vmatpush2.bf16.msra.mxu0 %v2223
    %2479 = vmatprep.mubr.bf16.mxu0 %v1654
    %2480 = vmatmul.mubr.bf16.gmra.mxu0 %v1653
    %v2481 = vpop.f32.mrf.mxu0
    %v2482 = vadd.f32 %v1790, %v2481
    %v2483 = vpop.f32.mrf.mxu0
    %v2484 = vadd.f32 %v1794, %v2483
    %v2485 = vpop.f32.mrf.mxu0
    %v2486 = vadd.f32 %v1790, %v2485
    %v2487 = vpop.f32.mrf.mxu0
    %v2488 = vadd.f32 %v1794, %v2487
    %2489 = vdwg.mxu0
    %2490 = vmatprep.subr.bf16.mxu0 %v2284
    %2491 = vmatpush1.bf16.msra.mxu0 %v2283
    %2492 = vmatprep.subr.bf16.mxu0 %v2280
    %2493 = vmatpush1.bf16.msra.mxu0 %v2279
    %2494 = vmatprep.subr.bf16.mxu0 %v2276
    %2495 = vmatpush1.bf16.msra.mxu0 %v2275
    %2496 = vmatprep.subr.bf16.mxu0 %v2272
    %2497 = vmatpush1.bf16.msra.mxu0 %v2271
    %2498 = vmatprep.subr.bf16.mxu0 %v2268
    %2499 = vmatpush1.bf16.msra.mxu0 %v2267
    %2500 = vmatprep.subr.bf16.mxu0 %v2264
    %2501 = vmatpush1.bf16.msra.mxu0 %v2263
    %2502 = vmatprep.subr.bf16.mxu0 %v2260
    %2503 = vmatpush1.bf16.msra.mxu0 %v2259
    %2504 = vmatprep.subr.bf16.mxu0 %v2256
    %2505 = vmatpush1.bf16.msra.mxu0 %v2255
    %2506 = vmatprep.subr.bf16.mxu0 %v2316
    %2507 = vmatpush2.bf16.msra.mxu0 %v2315
    %2508 = vmatprep.subr.bf16.mxu0 %v2312
    %2509 = vmatpush2.bf16.msra.mxu0 %v2311
    %2510 = vmatprep.subr.bf16.mxu0 %v2308
    %2511 = vmatpush2.bf16.msra.mxu0 %v2307
    %2512 = vmatprep.subr.bf16.mxu0 %v2304
    %2513 = vmatpush2.bf16.msra.mxu0 %v2303
    %2514 = vmatprep.subr.bf16.mxu0 %v2300
    %2515 = vmatpush2.bf16.msra.mxu0 %v2299
    %2516 = vmatprep.subr.bf16.mxu0 %v2296
    %2517 = vmatpush2.bf16.msra.mxu0 %v2295
    %2518 = vmatprep.subr.bf16.mxu0 %v2292
    %2519 = vmatpush2.bf16.msra.mxu0 %v2291
    %2520 = vmatprep.subr.bf16.mxu0 %v2288
    %2521 = vmatpush2.bf16.msra.mxu0 %v2287
    %2522 = vmatprep.mubr.bf16.mxu0 %v1656
    %2523 = vmatmul.mubr.bf16.gmra.mxu0 %v1655
    %v2524 = vpop.f32.mrf.mxu0
    %v2525 = vadd.f32 %v2482, %v2524
    %v2526 = vpop.f32.mrf.mxu0
    %v2527 = vadd.f32 %v2484, %v2526
    %v2528 = vpop.f32.mrf.mxu0
    %v2529 = vadd.f32 %v2486, %v2528
    %v2530 = vpop.f32.mrf.mxu0
    %v2531 = vadd.f32 %v2488, %v2530
    %2532 = vdwg.mxu0
    %2533 = vmatprep.subr.bf16.mxu0 %v2222
    %2534 = vmatpush1.bf16.msra.mxu0 %v2221
    %2535 = vmatprep.subr.bf16.mxu0 %v2218
    %2536 = vmatpush1.bf16.msra.mxu0 %v2217
    %2537 = vmatprep.subr.bf16.mxu0 %v2214
    %2538 = vmatpush1.bf16.msra.mxu0 %v2213
    %2539 = vmatprep.subr.bf16.mxu0 %v2210
    %2540 = vmatpush1.bf16.msra.mxu0 %v2209
    %2541 = vmatprep.subr.bf16.mxu0 %v2206
    %2542 = vmatpush1.bf16.msra.mxu0 %v2205
    %2543 = vmatprep.subr.bf16.mxu0 %v2202
    %2544 = vmatpush1.bf16.msra.mxu0 %v2201
    %2545 = vmatprep.subr.bf16.mxu0 %v2198
    %2546 = vmatpush1.bf16.msra.mxu0 %v2197
    %2547 = vmatprep.subr.bf16.mxu0 %v2194
    %2548 = vmatpush1.bf16.msra.mxu0 %v2193
    %2549 = vmatprep.subr.bf16.mxu0 %v2254
    %2550 = vmatpush2.bf16.msra.mxu0 %v2253
    %2551 = vmatprep.subr.bf16.mxu0 %v2250
    %2552 = vmatpush2.bf16.msra.mxu0 %v2249
    %2553 = vmatprep.subr.bf16.mxu0 %v2246
    %2554 = vmatpush2.bf16.msra.mxu0 %v2245
    %2555 = vmatprep.subr.bf16.mxu0 %v2242
    %2556 = vmatpush2.bf16.msra.mxu0 %v2241
    %2557 = vmatprep.subr.bf16.mxu0 %v2238
    %2558 = vmatpush2.bf16.msra.mxu0 %v2237
    %2559 = vmatprep.subr.bf16.mxu0 %v2234
    %2560 = vmatpush2.bf16.msra.mxu0 %v2233
    %2561 = vmatprep.subr.bf16.mxu0 %v2230
    %2562 = vmatpush2.bf16.msra.mxu0 %v2229
    %2563 = vmatprep.subr.bf16.mxu0 %v2226
    %2564 = vmatpush2.bf16.msra.mxu0 %v2225
    %2565 = vmatprep.mubr.bf16.mxu0 %v1654
    %2566 = vmatmul.mubr.bf16.gmra.mxu0 %v1653
    %v2567 = vpop.f32.mrf.mxu0
    %v2568 = vadd.f32 %v1798, %v2567
    %v2569 = vpop.f32.mrf.mxu0
    %v2570 = vadd.f32 %v1802, %v2569
    %v2571 = vpop.f32.mrf.mxu0
    %v2572 = vadd.f32 %v1798, %v2571
    %v2573 = vpop.f32.mrf.mxu0
    %v2574 = vadd.f32 %v1802, %v2573
    %2575 = vdwg.mxu0
    %2576 = vmatprep.subr.bf16.mxu0 %v2286
    %2577 = vmatpush1.bf16.msra.mxu0 %v2285
    %2578 = vmatprep.subr.bf16.mxu0 %v2282
    %2579 = vmatpush1.bf16.msra.mxu0 %v2281
    %2580 = vmatprep.subr.bf16.mxu0 %v2278
    %2581 = vmatpush1.bf16.msra.mxu0 %v2277
    %2582 = vmatprep.subr.bf16.mxu0 %v2274
    %2583 = vmatpush1.bf16.msra.mxu0 %v2273
    %2584 = vmatprep.subr.bf16.mxu0 %v2270
    %2585 = vmatpush1.bf16.msra.mxu0 %v2269
    %2586 = vmatprep.subr.bf16.mxu0 %v2266
    %2587 = vmatpush1.bf16.msra.mxu0 %v2265
    %2588 = vmatprep.subr.bf16.mxu0 %v2262
    %2589 = vmatpush1.bf16.msra.mxu0 %v2261
    %2590 = vmatprep.subr.bf16.mxu0 %v2258
    %2591 = vmatpush1.bf16.msra.mxu0 %v2257
    %2592 = vmatprep.subr.bf16.mxu0 %v2318
    %2593 = vmatpush2.bf16.msra.mxu0 %v2317
    %2594 = vmatprep.subr.bf16.mxu0 %v2314
    %2595 = vmatpush2.bf16.msra.mxu0 %v2313
    %2596 = vmatprep.subr.bf16.mxu0 %v2310
    %2597 = vmatpush2.bf16.msra.mxu0 %v2309
    %2598 = vmatprep.subr.bf16.mxu0 %v2306
    %2599 = vmatpush2.bf16.msra.mxu0 %v2305
    %2600 = vmatprep.subr.bf16.mxu0 %v2302
    %2601 = vmatpush2.bf16.msra.mxu0 %v2301
    %2602 = vmatprep.subr.bf16.mxu0 %v2298
    %2603 = vmatpush2.bf16.msra.mxu0 %v2297
    %2604 = vmatprep.subr.bf16.mxu0 %v2294
    %2605 = vmatpush2.bf16.msra.mxu0 %v2293
    %2606 = vmatprep.subr.bf16.mxu0 %v2290
    %2607 = vmatpush2.bf16.msra.mxu0 %v2289
    %2608 = vmatprep.mubr.bf16.mxu0 %v1656
    %2609 = vmatmul.mubr.bf16.gmra.mxu0 %v1655
    %v2610 = vpop.f32.mrf.mxu0
    %v2611 = vadd.f32 %v2568, %v2610
    %v2612 = vpop.f32.mrf.mxu0
    %v2613 = vadd.f32 %v2570, %v2612
    %v2614 = vpop.f32.mrf.mxu0
    %v2615 = vadd.f32 %v2572, %v2614
    %v2616 = vpop.f32.mrf.mxu0
    %v2617 = vadd.f32 %v2574, %v2616
    %2618 = vdwg.mxu0
    %v2619 = vmax.f32 %v2525, 0.0
    %v2620 = vmax.f32 %v2527, 0.0
    %v2621 = vmax.f32 %v2611, 0.0
    %v2622 = vmax.f32 %v2613, 0.0
    %v2623 = vmax.f32 %v2529, 0.0
    %v2624 = vmax.f32 %v2531, 0.0
    %v2625 = vmax.f32 %v2615, 0.0
    %v2626 = vmax.f32 %v2617, 0.0
    %v2627 = vpack.c.bf16 %v2623, %v2619
    %v2628 = vpack.c.bf16 %v2624, %v2620
    %v2629 = vpack.c.bf16 %v2625, %v2621
    %v2630 = vpack.c.bf16 %v2626, %v2622
    %v2631 = vld [vmem:[%s5] sm:$0xf]
    %v2632 = vld [vmem:[%s5 + $0x4] sm:$0xf]
    %v2633 = vld [vmem:[%s5 + $0x8] sm:$0xf]
    %v2634 = vld [vmem:[%s5 + $0xc] sm:$0xf]
    %v2635 = vld [vmem:[%s5 + $0x10] sm:$0xf]
    %v2636 = vld [vmem:[%s5 + $0x14] sm:$0xf]
    %v2637 = vld [vmem:[%s5 + $0x18] sm:$0xf]
    %v2638 = vld [vmem:[%s5 + $0x1c] sm:$0xf]
    %v2639 = vld [vmem:[%s5 + $0x20] sm:$0xf]
    %v2640 = vld [vmem:[%s5 + $0x24] sm:$0xf]
    %v2641 = vld [vmem:[%s5 + $0x28] sm:$0xf]
    %v2642 = vld [vmem:[%s5 + $0x2c] sm:$0xf]
    %v2643 = vld [vmem:[%s5 + $0x30] sm:$0xf]
    %v2644 = vld [vmem:[%s5 + $0x34] sm:$0xf]
    %v2645 = vld [vmem:[%s5 + $0x38] sm:$0xf]
    %v2646 = vld [vmem:[%s5 + $0x3c] sm:$0xf]
    %v2647 = vld [vmem:[%s5 + $0x40] sm:$0xf]
    %v2648 = vld [vmem:[%s5 + $0x44] sm:$0xf]
    %v2649 = vld [vmem:[%s5 + $0x48] sm:$0xf]
    %v2650 = vld [vmem:[%s5 + $0x4c] sm:$0xf]
    %v2651 = vld [vmem:[%s5 + $0x50] sm:$0xf]
    %v2652 = vld [vmem:[%s5 + $0x54] sm:$0xf]
    %v2653 = vld [vmem:[%s5 + $0x58] sm:$0xf]
    %v2654 = vld [vmem:[%s5 + $0x5c] sm:$0xf]
    %v2655 = vld [vmem:[%s5 + $0x60] sm:$0xf]
    %v2656 = vld [vmem:[%s5 + $0x64] sm:$0xf]
    %v2657 = vld [vmem:[%s5 + $0x68] sm:$0xf]
    %v2658 = vld [vmem:[%s5 + $0x6c] sm:$0xf]
    %v2659 = vld [vmem:[%s5 + $0x70] sm:$0xf]
    %v2660 = vld [vmem:[%s5 + $0x74] sm:$0xf]
    %v2661 = vld [vmem:[%s5 + $0x78] sm:$0xf]
    %v2662 = vld [vmem:[%s5 + $0x7c] sm:$0xf]
    %v2663 = vld [vmem:[%s5 + $0x80] sm:$0xf]
    %v2664 = vld [vmem:[%s5 + $0x84] sm:$0xf]
    %v2665 = vld [vmem:[%s5 + $0x88] sm:$0xf]
    %v2666 = vld [vmem:[%s5 + $0x8c] sm:$0xf]
    %v2667 = vld [vmem:[%s5 + $0x90] sm:$0xf]
    %v2668 = vld [vmem:[%s5 + $0x94] sm:$0xf]
    %v2669 = vld [vmem:[%s5 + $0x98] sm:$0xf]
    %v2670 = vld [vmem:[%s5 + $0x9c] sm:$0xf]
    %v2671 = vld [vmem:[%s5 + $0xa0] sm:$0xf]
    %v2672 = vld [vmem:[%s5 + $0xa4] sm:$0xf]
    %v2673 = vld [vmem:[%s5 + $0xa8] sm:$0xf]
    %v2674 = vld [vmem:[%s5 + $0xac] sm:$0xf]
    %v2675 = vld [vmem:[%s5 + $0xb0] sm:$0xf]
    %v2676 = vld [vmem:[%s5 + $0xb4] sm:$0xf]
    %v2677 = vld [vmem:[%s5 + $0xb8] sm:$0xf]
    %v2678 = vld [vmem:[%s5 + $0xbc] sm:$0xf]
    %v2679 = vld [vmem:[%s5 + $0xc0] sm:$0xf]
    %v2680 = vld [vmem:[%s5 + $0xc4] sm:$0xf]
    %v2681 = vld [vmem:[%s5 + $0xc8] sm:$0xf]
    %v2682 = vld [vmem:[%s5 + $0xcc] sm:$0xf]
    %v2683 = vld [vmem:[%s5 + $0xd0] sm:$0xf]
    %v2684 = vld [vmem:[%s5 + $0xd4] sm:$0xf]
    %v2685 = vld [vmem:[%s5 + $0xd8] sm:$0xf]
    %v2686 = vld [vmem:[%s5 + $0xdc] sm:$0xf]
    %v2687 = vld [vmem:[%s5 + $0xe0] sm:$0xf]
    %v2688 = vld [vmem:[%s5 + $0xe4] sm:$0xf]
    %v2689 = vld [vmem:[%s5 + $0xe8] sm:$0xf]
    %v2690 = vld [vmem:[%s5 + $0xec] sm:$0xf]
    %v2691 = vld [vmem:[%s5 + $0xf0] sm:$0xf]
    %v2692 = vld [vmem:[%s5 + $0xf4] sm:$0xf]
    %v2693 = vld [vmem:[%s5 + $0xf8] sm:$0xf]
    %v2694 = vld [vmem:[%s5 + $0xfc] sm:$0xf]
    %v2695 = vld [vmem:[%s6] sm:$0x1]
    %v2697 = vlaneseq
    %v2698 = vshrl.u32 %v2697, 7
    %v2699 = vsub.s32 0, %v2698
    %v2700 = vrot.slane %v2695, %v2699
    %v2766 = vunpack.c.l.b16 %v2631
    %v2767 = vunpack.c.l.b16 %v2632
    %v2768 = vunpack.c.l.b16 %v2633
    %v2769 = vunpack.c.l.b16 %v2634
    %v2770 = vunpack.c.l.b16 %v2635
    %v2771 = vunpack.c.l.b16 %v2636
    %v2772 = vunpack.c.l.b16 %v2637
    %v2773 = vunpack.c.l.b16 %v2638
    %v2774 = vunpack.c.l.b16 %v2639
    %v2775 = vunpack.c.l.b16 %v2640
    %v2776 = vunpack.c.l.b16 %v2641
    %v2777 = vunpack.c.l.b16 %v2642
    %v2778 = vunpack.c.l.b16 %v2643
    %v2779 = vunpack.c.l.b16 %v2644
    %v2780 = vunpack.c.l.b16 %v2645
    %v2781 = vunpack.c.l.b16 %v2646
    %v2782 = vunpack.c.l.b16 %v2647
    %v2783 = vunpack.c.l.b16 %v2648
    %v2784 = vunpack.c.l.b16 %v2649
    %v2785 = vunpack.c.l.b16 %v2650
    %v2786 = vunpack.c.l.b16 %v2651
    %v2787 = vunpack.c.l.b16 %v2652
    %v2788 = vunpack.c.l.b16 %v2653
    %v2789 = vunpack.c.l.b16 %v2654
    %v2790 = vunpack.c.l.b16 %v2655
    %v2791 = vunpack.c.l.b16 %v2656
    %v2792 = vunpack.c.l.b16 %v2657
    %v2793 = vunpack.c.l.b16 %v2658
    %v2794 = vunpack.c.l.b16 %v2659
    %v2795 = vunpack.c.l.b16 %v2660
    %v2796 = vunpack.c.l.b16 %v2661
    %v2797 = vunpack.c.l.b16 %v2662
    %v2798 = vunpack.c.l.b16 %v2663
    %v2799 = vunpack.c.l.b16 %v2664
    %v2800 = vunpack.c.l.b16 %v2665
    %v2801 = vunpack.c.l.b16 %v2666
    %v2802 = vunpack.c.l.b16 %v2667
    %v2803 = vunpack.c.l.b16 %v2668
    %v2804 = vunpack.c.l.b16 %v2669
    %v2805 = vunpack.c.l.b16 %v2670
    %v2806 = vunpack.c.l.b16 %v2671
    %v2807 = vunpack.c.l.b16 %v2672
    %v2808 = vunpack.c.l.b16 %v2673
    %v2809 = vunpack.c.l.b16 %v2674
    %v2810 = vunpack.c.l.b16 %v2675
    %v2811 = vunpack.c.l.b16 %v2676
    %v2812 = vunpack.c.l.b16 %v2677
    %v2813 = vunpack.c.l.b16 %v2678
    %v2814 = vunpack.c.l.b16 %v2679
    %v2815 = vunpack.c.l.b16 %v2680
    %v2816 = vunpack.c.l.b16 %v2681
    %v2817 = vunpack.c.l.b16 %v2682
    %v2818 = vunpack.c.l.b16 %v2683
    %v2819 = vunpack.c.l.b16 %v2684
    %v2820 = vunpack.c.l.b16 %v2685
    %v2821 = vunpack.c.l.b16 %v2686
    %v2822 = vunpack.c.l.b16 %v2687
    %v2823 = vunpack.c.l.b16 %v2688
    %v2824 = vunpack.c.l.b16 %v2689
    %v2825 = vunpack.c.l.b16 %v2690
    %v2826 = vunpack.c.l.b16 %v2691
    %v2827 = vunpack.c.l.b16 %v2692
    %v2828 = vunpack.c.l.b16 %v2693
    %v2829 = vunpack.c.l.b16 %v2694
    %v2830 = vpack.c.b16 %v2767, %v2766
    %v2831 = vpack.c.b16 %v2769, %v2768
    %v2832 = vpack.c.b16 %v2771, %v2770
    %v2833 = vpack.c.b16 %v2773, %v2772
    %v2834 = vpack.c.b16 %v2775, %v2774
    %v2835 = vpack.c.b16 %v2777, %v2776
    %v2836 = vpack.c.b16 %v2779, %v2778
    %v2837 = vpack.c.b16 %v2781, %v2780
    %v2838 = vpack.c.b16 %v2783, %v2782
    %v2839 = vpack.c.b16 %v2785, %v2784
    %v2840 = vpack.c.b16 %v2787, %v2786
    %v2841 = vpack.c.b16 %v2789, %v2788
    %v2842 = vpack.c.b16 %v2791, %v2790
    %v2843 = vpack.c.b16 %v2793, %v2792
    %v2844 = vpack.c.b16 %v2795, %v2794
    %v2845 = vpack.c.b16 %v2797, %v2796
    %v2846 = vpack.c.b16 %v2799, %v2798
    %v2847 = vpack.c.b16 %v2801, %v2800
    %v2848 = vpack.c.b16 %v2803, %v2802
    %v2849 = vpack.c.b16 %v2805, %v2804
    %v2850 = vpack.c.b16 %v2807, %v2806
    %v2851 = vpack.c.b16 %v2809, %v2808
    %v2852 = vpack.c.b16 %v2811, %v2810
    %v2853 = vpack.c.b16 %v2813, %v2812
    %v2854 = vpack.c.b16 %v2815, %v2814
    %v2855 = vpack.c.b16 %v2817, %v2816
    %v2856 = vpack.c.b16 %v2819, %v2818
    %v2857 = vpack.c.b16 %v2821, %v2820
    %v2858 = vpack.c.b16 %v2823, %v2822
    %v2859 = vpack.c.b16 %v2825, %v2824
    %v2860 = vpack.c.b16 %v2827, %v2826
    %v2861 = vpack.c.b16 %v2829, %v2828
    %2894 = vmatprep.subr.bf16.mxu0 0
    %2895 = vmatpush1.bf16.msra.mxu0 %v2837
    %2896 = vmatprep.subr.bf16.mxu0 0
    %2897 = vmatpush1.bf16.msra.mxu0 %v2836
    %2898 = vmatprep.subr.bf16.mxu0 0
    %2899 = vmatpush1.bf16.msra.mxu0 %v2835
    %2900 = vmatprep.subr.bf16.mxu0 0
    %2901 = vmatpush1.bf16.msra.mxu0 %v2834
    %2902 = vmatprep.subr.bf16.mxu0 0
    %2903 = vmatpush1.bf16.msra.mxu0 %v2833
    %2904 = vmatprep.subr.bf16.mxu0 0
    %2905 = vmatpush1.bf16.msra.mxu0 %v2832
    %2906 = vmatprep.subr.bf16.mxu0 0
    %2907 = vmatpush1.bf16.msra.mxu0 %v2831
    %2908 = vmatprep.subr.bf16.mxu0 0
    %2909 = vmatpush1.bf16.msra.mxu0 %v2830
    %2910 = vmatprep.subr.bf16.mxu0 0
    %2911 = vmatpush2.bf16.msra.mxu0 %v2845
    %2912 = vmatprep.subr.bf16.mxu0 0
    %2913 = vmatpush2.bf16.msra.mxu0 %v2844
    %2914 = vmatprep.subr.bf16.mxu0 0
    %2915 = vmatpush2.bf16.msra.mxu0 %v2843
    %2916 = vmatprep.subr.bf16.mxu0 0
    %2917 = vmatpush2.bf16.msra.mxu0 %v2842
    %2918 = vmatprep.subr.bf16.mxu0 0
    %2919 = vmatpush2.bf16.msra.mxu0 %v2841
    %2920 = vmatprep.subr.bf16.mxu0 0
    %2921 = vmatpush2.bf16.msra.mxu0 %v2840
    %2922 = vmatprep.subr.bf16.mxu0 0
    %2923 = vmatpush2.bf16.msra.mxu0 %v2839
    %2924 = vmatprep.subr.bf16.mxu0 0
    %2925 = vmatpush2.bf16.msra.mxu0 %v2838
    %2926 = vmatprep.mubr.bf16.mxu0 %v2628
    %2927 = vmatmul.mubr.bf16.gmra.mxu0 %v2627
    %v2928 = vpop.f32.mrf.mxu0
    %v2929 = vadd.f32 %v2700, %v2928
    %v2930 = vpop.f32.mrf.mxu0
    %v2931 = vpop.f32.mrf.mxu0
    %v2932 = vadd.f32 %v2700, %v2931
    %v2933 = vpop.f32.mrf.mxu0
    %2934 = vdwg.mxu0
    %2935 = vmatprep.subr.bf16.mxu0 0
    %2936 = vmatpush1.bf16.msra.mxu0 %v2853
    %2937 = vmatprep.subr.bf16.mxu0 0
    %2938 = vmatpush1.bf16.msra.mxu0 %v2852
    %2939 = vmatprep.subr.bf16.mxu0 0
    %2940 = vmatpush1.bf16.msra.mxu0 %v2851
    %2941 = vmatprep.subr.bf16.mxu0 0
    %2942 = vmatpush1.bf16.msra.mxu0 %v2850
    %2943 = vmatprep.subr.bf16.mxu0 0
    %2944 = vmatpush1.bf16.msra.mxu0 %v2849
    %2945 = vmatprep.subr.bf16.mxu0 0
    %2946 = vmatpush1.bf16.msra.mxu0 %v2848
    %2947 = vmatprep.subr.bf16.mxu0 0
    %2948 = vmatpush1.bf16.msra.mxu0 %v2847
    %2949 = vmatprep.subr.bf16.mxu0 0
    %2950 = vmatpush1.bf16.msra.mxu0 %v2846
    %2951 = vmatprep.subr.bf16.mxu0 0
    %2952 = vmatpush2.bf16.msra.mxu0 %v2861
    %2953 = vmatprep.subr.bf16.mxu0 0
    %2954 = vmatpush2.bf16.msra.mxu0 %v2860
    %2955 = vmatprep.subr.bf16.mxu0 0
    %2956 = vmatpush2.bf16.msra.mxu0 %v2859
    %2957 = vmatprep.subr.bf16.mxu0 0
    %2958 = vmatpush2.bf16.msra.mxu0 %v2858
    %2959 = vmatprep.subr.bf16.mxu0 0
    %2960 = vmatpush2.bf16.msra.mxu0 %v2857
    %2961 = vmatprep.subr.bf16.mxu0 0
    %2962 = vmatpush2.bf16.msra.mxu0 %v2856
    %2963 = vmatprep.subr.bf16.mxu0 0
    %2964 = vmatpush2.bf16.msra.mxu0 %v2855
    %2965 = vmatprep.subr.bf16.mxu0 0
    %2966 = vmatpush2.bf16.msra.mxu0 %v2854
    %2967 = vmatprep.mubr.bf16.mxu0 %v2630
    %2968 = vmatmul.mubr.bf16.gmra.mxu0 %v2629
    %v2969 = vpop.f32.mrf.mxu0
    %v2970 = vadd.f32 %v2929, %v2969
    %v2971 = vpop.f32.mrf.mxu0
    %v2972 = vpop.f32.mrf.mxu0
    %v2973 = vadd.f32 %v2932, %v2972
    %v2974 = vpop.f32.mrf.mxu0
    %2975 = vdwg.mxu0
    %v2976 = vmax.f32 %v2970, 0.0
    %v2977 = vmax.f32 %v2973, 0.0
    %2978 = vst [vmem:[#allocation7] sm:$0xff] %v2976
    %2979 = vst [vmem:[#allocation7 + $0x8] sm:$0xff] %v2977
    // Predicated region
    $region38: #{_lambda_.1} parent=1 // pred_check
      _
    $region39: #{_lambda_.1} parent=1 // pred_check_branch
      %2981 = sbr.rel (0) target = $region41
    $region40: #{_lambda_.1} parent=1 // pred_region
      %s2983 = ssub.s32 256, 256
      %2984 = vsyncadd [#allocation4], %s2983
      %s2985 = sshll.u32 [#allocation7], 4
      %s2986 = int_to_ptr.vmem [resolvable:$true] %s2985
      %2991 = dma.vmem_to_hbm [thread:$0]  %s2986, 256, %s7, [#allocation4], 128, 128, 8
    $region41: #{_lambda_.1} parent=1 // pred_fallthru
      _
    // Predicated region
    $region42: #{_lambda_.1} parent=1 // pred_check
      _
    $region43: #{_lambda_.1} parent=1 // pred_check_branch
      %2993 = sbr.rel (0) target = $region45
    $region44: #{_lambda_.1} parent=1 // pred_region
      %2994 = dma.done [#allocation4], 256
    $region45: #{_lambda_.1} parent=1 // pred_fallthru
      _
    %2995 = vsyncpa [#allocation3], 1
    %2996 = vsyncpa [#allocation6], 1
    %2997 = vsyncpa [#allocation4], 1

</llo_original>
